<compile_context>
chip_gen: v5e
topology: v5e:2x2
jax: 0.10.0
libtpu: 0.0.40
codegen_flags: <defaults>
</compile_context>

<pallas_src>
import functools

import numpy as np
import jax
import jax.numpy as jnp
from jax.experimental import pallas as pl
from jax.experimental.pallas import tpu as pltpu

_EPS = 1e-5                      # torch.nn.GroupNorm default eps
_INV_SQRT2 = 0.7071067811865476


def _num_groups(c):
    return min(32, c // 4) if c >= 4 else 1


# ------------------------------ in-kernel math -------------------------------

def _group_maps(C, HW):
    """One-hot group maps (G,C)/(C,G) + 1/(Cpg*HW), built from iota in-kernel."""
    G = _num_groups(C)
    Cpg = C // G
    gi = jax.lax.broadcasted_iota(jnp.int32, (G, C), 0)
    ci = jax.lax.broadcasted_iota(jnp.int32, (G, C), 1)
    lo = gi * Cpg
    gmap_gc = ((ci >= lo) & (ci < lo + Cpg)).astype(jnp.float32)      # (G, C)
    gi2 = jax.lax.broadcasted_iota(jnp.int32, (C, G), 1)
    ci2 = jax.lax.broadcasted_iota(jnp.int32, (C, G), 0)
    lo2 = gi2 * Cpg
    gmap_cg = ((ci2 >= lo2) & (ci2 < lo2 + Cpg)).astype(jnp.float32)  # (C, G)
    return gmap_gc, gmap_cg, 1.0 / float(Cpg * HW)


def _gn_gelu(y, gamma, beta, gmap_gc, gmap_cg, inv_n):
    """GroupNorm (per sample) + exact erf GELU on a (C, HWp) f32 tile.

    All statistics stay f32.  The two per-channel stats (sum, sum-of-squares)
    are packed into ONE (C,2) RHS so the group combine + broadcast-back are a
    single pair of N=2 matmuls instead of four serial N=1 matmuls.
    """
    s1 = jnp.sum(y, axis=1, keepdims=True)                        # (C, 1)
    s2 = jnp.sum(y * y, axis=1, keepdims=True)                    # (C, 1)
    stats_g = jnp.dot(gmap_gc, jnp.concatenate([s1, s2], axis=1),
                      preferred_element_type=jnp.float32) * inv_n  # (G, 2)
    mean_g = stats_g[:, 0:1]
    var_g = jnp.maximum(stats_g[:, 1:2] - mean_g * mean_g, 0.0)    # no rsqrt NaN
    inv_g = jax.lax.rsqrt(var_g + _EPS)
    mi_c = jnp.dot(gmap_cg, jnp.concatenate([mean_g, inv_g], axis=1),
                   preferred_element_type=jnp.float32)             # (C, 2)
    a = mi_c[:, 1:2] * gamma                                       # pre-combined affine
    b = beta - mi_c[:, 0:1] * a
    yn = y * a + b
    # exact (erf) GELU, matching torch.nn.GELU() default
    return 0.5 * yn * (1.0 + jax.lax.erf(yn * _INV_SQRT2))


def _fire_kernel(x_ref, wsq_ref, we1_ref, we3_ref, ab_ref, o_ref, col_ref,
                 *, H, W, HW):
    Cs = wsq_ref.shape[0]
    Ce1 = we1_ref.shape[0]
    Ce3 = we3_ref.shape[0]
    HWp = x_ref.shape[-1]                       # lane-padded spatial (128 mult)
    padded = HWp != HW

    # packed per-channel affine: rows [squeeze | e1 | e3], cols [gamma, beta]
    sg, sb = ab_ref[0:Cs, 0:1], ab_ref[0:Cs, 1:2]
    g1, b1 = ab_ref[Cs:Cs + Ce1, 0:1], ab_ref[Cs:Cs + Ce1, 1:2]
    g3, b3 = ab_ref[Cs + Ce1:Cs + Ce1 + Ce3, 0:1], ab_ref[Cs + Ce1:Cs + Ce1 + Ce3, 1:2]

    # tiny one-hot group maps, built once per grid step
    maps_s = _group_maps(Cs, HW)
    maps_1 = _group_maps(Ce1, HW)
    maps_3 = _group_maps(Ce3, HW)

    # 3x3 tap shifts + border masks (hoisted out of the per-sample loop)
    lane = jax.lax.broadcasted_iota(jnp.int32, (Cs, HWp), 1)
    colv = (lane & (W - 1)) if (W & (W - 1)) == 0 else lane % W
    row_ok = {-1: lane >= W, 1: lane < (H - 1) * W}
    col_ok = {-1: colv >= 1, 1: colv <= W - 2}
    base = (lane < HW) if padded else None      # keep padded lanes exactly zero
    shifts, masks = [], []
    for dy in (-1, 0, 1):
        for dx in (-1, 0, 1):
            off = dy * W + dx
            shifts.append((-off) % HWp)         # tap[p] = s[p + off] (masked)
            m = base
            if dy != 0:
                m = row_ok[dy] if m is None else (m & row_ok[dy])
            if dx != 0:
                m = col_ok[dx] if m is None else (m & col_ok[dx])
            masks.append(m)

    for bb in range(x_ref.shape[0]):            # static unroll over batch block
        x = x_ref[bb]                                               # (Cin, HWp) bf16

        # ---- squeeze 1x1 + GN + GELU (stays resident in VMEM) ----
        ysq = jnp.dot(wsq_ref[...], x, preferred_element_type=jnp.float32)
        s = _gn_gelu(ysq, sg, sb, *maps_s)                          # (Cs, HWp) f32
        if padded:
            s = jnp.where(base, s, 0.0)
        s16 = s.astype(jnp.bfloat16)

        # ---- expand 1x1 branch -> channels [0, Ce1) of the fused output ----
        y1 = jnp.dot(we1_ref[...], s16, preferred_element_type=jnp.float32)
        o_ref[bb, 0:Ce1, :] = _gn_gelu(y1, g1, b1, *maps_1)

        # ---- expand 3x3: 9 rolled+masked taps -> col scratch -> ONE matmul ----
        for t in range(9):
            tap = s if shifts[t] == 0 else pltpu.roll(s, shift=shifts[t], axis=1)
            if masks[t] is not None:
                tap = jnp.where(masks[t], tap, 0.0)
            col_ref[t * Cs:(t + 1) * Cs, :] = tap   # aligned sublane offsets (f32)
        y3 = jnp.dot(we3_ref[...], col_ref[...].astype(jnp.bfloat16),
                     preferred_element_type=jnp.float32)
        o_ref[bb, Ce1:Ce1 + Ce3, :] = _gn_gelu(y3, g3, b3, *maps_3)


# --------------------------------- wrapper ------------------------------------

def _fold_batch():
    """True on single-TensorCore chips (v5e/v6e): fold the whole batch into one
    grid step.  On megacore parts keep the (B,) 'parallel' grid so the samples
    split across TensorCores."""
    try:
        kind = jax.devices()[0].device_kind.lower()
    except Exception:
        return True
    return any(m in kind for m in
               ("v5e", "v5 lite", "v5lite", "v6e", "v6 lite", "v6lite"))


def fire_block_forward(x_nchw, params):
    """FireBlock forward. x_nchw: (B, Cin, H, W) f32 -> (B, Ce1+Ce3, H, W) f32."""
    B, Cin, H, W = x_nchw.shape
    HW = H * W
    HWp = ((HW + 127) // 128) * 128            # lane-dense -> unmasked wide stores
    Cs = params["sq_w"].shape[0]
    Ce1 = params["e1_w"].shape[0]
    Ce3 = params["e3_w"].shape[0]
    Cout = Ce1 + Ce3
    Ctot = Cs + Ce1 + Ce3

    x = x_nchw.reshape(B, Cin, HW)             # free reshape (no transpose)
    if HWp != HW:
        x = jnp.pad(x, ((0, 0), (0, 0), (0, HWp - HW)))
    x = x.astype(jnp.bfloat16)                 # bf16 MXU operand, half the DMA

    wsq = params["sq_w"].astype(jnp.bfloat16)                        # (Cs, Cin)
    we1 = params["e1_w"].astype(jnp.bfloat16)                        # (Ce1, Cs)
    # (Ce3, Cs, 3, 3) OIHW -> (Ce3, 9*Cs), tap-major / channel-minor ordering
    we3 = jnp.transpose(params["e3_w"], (0, 2, 3, 1)).reshape(Ce3, 9 * Cs)
    we3 = we3.astype(jnp.bfloat16)
    # packed per-channel affine: rows [squeeze | e1 | e3], cols [gamma, beta]
    ab = jnp.stack(
        [jnp.concatenate([params["sq_g"], params["e1_g"], params["e3_g"]]),
         jnp.concatenate([params["sq_b"], params["e1_b"], params["e3_b"]])],
        axis=1).astype(jnp.float32)                                   # (Ctot, 2)

    BB = B if _fold_batch() else 1             # samples per grid step

    kernel = functools.partial(_fire_kernel, H=H, W=W, HW=HW)
    out = pl.pallas_call(
        kernel,
        out_shape=jax.ShapeDtypeStruct((B, Cout, HWp), jnp.float32),
        grid=(B // BB,),
        in_specs=[
            pl.BlockSpec((BB, Cin, HWp), lambda b: (b, 0, 0)),
            pl.BlockSpec((Cs, Cin), lambda b: (0, 0)),
            pl.BlockSpec((Ce1, Cs), lambda b: (0, 0)),
            pl.BlockSpec((Ce3, 9 * Cs), lambda b: (0, 0)),
            pl.BlockSpec((Ctot, 2), lambda b: (0, 0)),
        ],
        out_specs=pl.BlockSpec((BB, Cout, HWp), lambda b: (b, 0, 0)),
        scratch_shapes=[pltpu.VMEM((9 * Cs, HWp), jnp.float32)],
        compiler_params=pltpu.CompilerParams(
            dimension_semantics=("parallel",),
            # tiny working set at demo sizes; explicit limit keeps headroom on
            # v7x's 64 MiB physical VMEM while being safe on v5e/v6e.
            # TODO(synk): at real SqueezeNet fire sizes (HW up to 55*55, large
            # channel counts) add a lane-tiled spatial grid axis with a 3x3
            # halo instead of holding whole-sample I/O + the 9x col buffer.
            vmem_limit_bytes=32 * 1024 * 1024,
        ),
    )(x, wsq, we1, we3, ab)

    if HWp != HW:
        out = out[:, :, :HW]
    return out.reshape(B, Cout, H, W)          # free reshape (no transpose)


# ---------------------------- params / reference ------------------------------

def init_params(key, cin, cs, ce1, ce3):
    ks = jax.random.split(key, 9)
    return {
        # conv weights stored PyTorch-style (out, in[, kh, kw]); bias=False as
        # in ConvBlock's default.
        "sq_w": jax.random.normal(ks[0], (cs, cin), jnp.float32) / np.sqrt(cin),
        "sq_g": 1.0 + 0.1 * jax.random.normal(ks[1], (cs,), jnp.float32),
        "sq_b": 0.1 * jax.random.normal(ks[2], (cs,), jnp.float32),
        "e1_w": jax.random.normal(ks[3], (ce1, cs), jnp.float32) / np.sqrt(cs),
        "e1_g": 1.0 + 0.1 * jax.random.normal(ks[4], (ce1,), jnp.float32),
        "e1_b": 0.1 * jax.random.normal(ks[5], (ce1,), jnp.float32),
        "e3_w": jax.random.normal(ks[6], (ce3, cs, 3, 3), jnp.float32) / np.sqrt(9 * cs),
        "e3_g": 1.0 + 0.1 * jax.random.normal(ks[7], (ce3,), jnp.float32),
        "e3_b": 0.1 * jax.random.normal(ks[8], (ce3,), jnp.float32),
    }


def _ref_conv_block(x, w_oihw, gamma, beta, padding):
    y = jax.lax.conv_general_dilated(
        x, w_oihw, (1, 1), [(padding, padding)] * 2,
        dimension_numbers=("NCHW", "OIHW", "NCHW"))
    B, C, H, W = y.shape
    g = _num_groups(C)
    yg = y.reshape(B, g, C // g, H, W)
    mean = yg.mean(axis=(2, 3, 4), keepdims=True)
    var = yg.var(axis=(2, 3, 4), keepdims=True)
    yn = ((yg - mean) / jnp.sqrt(var + _EPS)).reshape(B, C, H, W)
    yn = yn * gamma.reshape(1, C, 1, 1) + beta.reshape(1, C, 1, 1)
    return jax.nn.gelu(yn, approximate=False)


def ref_fire(x, p):
    s = _ref_conv_block(x, p["sq_w"][:, :, None, None], p["sq_g"], p["sq_b"], 0)
    e1 = _ref_conv_block(s, p["e1_w"][:, :, None, None], p["e1_g"], p["e1_b"], 0)
    e3 = _ref_conv_block(s, p["e3_w"], p["e3_g"], p["e3_b"], 1)
    return jnp.concatenate([e1, e3], axis=1)


if __name__ == "__main__":
    key = jax.random.PRNGKey(0)
    B, Cin, H, W = 2, 4, 16, 16          # H*W = 256 -> already lane-dense
    Cs, Ce1, Ce3 = 8, 16, 16
    kx_, kp_ = jax.random.split(key)
    x = jax.random.normal(kx_, (B, Cin, H, W), jnp.float32)
    params = init_params(kp_, Cin, Cs, Ce1, Ce3)

    out = jax.block_until_ready(fire_block_forward(x, params))
    assert out.shape == (B, Ce1 + Ce3, H, W)

    ref = jax.block_until_ready(ref_fire(x, params))
    # bf16 matmul operands (f32 accumulation/stats) -> looser tolerance than f32
    np.testing.assert_allclose(np.asarray(out), np.asarray(ref),
                               rtol=5e-2, atol=5e-2)
    print("KERNEL_OK")
</pallas_src>

<mosaic_0001>
module attributes {stable_mosaic.version = 11 : i64} {
  func.func @_fire_kernel(%arg0: i32, %arg1: memref<1x4x256xbf16, #tpu.memory_space<vmem>>, %arg2: memref<8x4xbf16, #tpu.memory_space<vmem>>, %arg3: memref<16x8xbf16, #tpu.memory_space<vmem>>, %arg4: memref<16x72xbf16, #tpu.memory_space<vmem>>, %arg5: memref<40x2xf32, #tpu.memory_space<vmem>>, %arg6: memref<1x32x256xf32, #tpu.memory_space<vmem>>, %arg7: memref<72x256xf32, #tpu.memory_space<vmem>>) attributes {dimension_semantics = [#tpu.dimension_semantics<parallel>], iteration_bounds = array<i64: 2>, scalar_prefetch = 0 : i64, scratch_operands = 1 : i64, tpu.core_type = #tpu.core_type<tc>, window_params = [{transform_indices = @transform_0, window_bounds = array<i64: 1, 4, 256>}, {pipeline_mode = #tpu.pipeline_mode<synchronous>, transform_indices = @transform_1, window_bounds = array<i64: 8, 4>}, {pipeline_mode = #tpu.pipeline_mode<synchronous>, transform_indices = @transform_2, window_bounds = array<i64: 16, 8>}, {pipeline_mode = #tpu.pipeline_mode<synchronous>, transform_indices = @transform_3, window_bounds = array<i64: 16, 72>}, {pipeline_mode = #tpu.pipeline_mode<synchronous>, transform_indices = @transform_4, window_bounds = array<i64: 40, 2>}, {transform_indices = @transform_5, window_bounds = array<i64: 1, 32, 256>}]} {
    %c0 = arith.constant 0 : index
    %c0_0 = arith.constant 0 : index
    %0 = vector.load %arg5[%c0, %c0_0] : memref<40x2xf32, #tpu.memory_space<vmem>>, vector<8x1xf32>
    %c0_1 = arith.constant 0 : index
    %c1 = arith.constant 1 : index
    %1 = vector.load %arg5[%c0_1, %c1] : memref<40x2xf32, #tpu.memory_space<vmem>>, vector<8x1xf32>
    %c8 = arith.constant 8 : index
    %c0_2 = arith.constant 0 : index
    %2 = vector.load %arg5[%c8, %c0_2] : memref<40x2xf32, #tpu.memory_space<vmem>>, vector<16x1xf32>
    %c8_3 = arith.constant 8 : index
    %c1_4 = arith.constant 1 : index
    %3 = vector.load %arg5[%c8_3, %c1_4] : memref<40x2xf32, #tpu.memory_space<vmem>>, vector<16x1xf32>
    %c24 = arith.constant 24 : index
    %c0_5 = arith.constant 0 : index
    %4 = vector.load %arg5[%c24, %c0_5] : memref<40x2xf32, #tpu.memory_space<vmem>>, vector<16x1xf32>
    %c24_6 = arith.constant 24 : index
    %c1_7 = arith.constant 1 : index
    %5 = vector.load %arg5[%c24_6, %c1_7] : memref<40x2xf32, #tpu.memory_space<vmem>>, vector<16x1xf32>
    %6 = tpu.iota {dimensions = array<i32: 0>} : vector<2x8xi32>
    %7 = tpu.iota {dimensions = array<i32: 1>} : vector<2x8xi32>
    %c4_i32 = arith.constant 4 : i32
    %8 = vector.broadcast %c4_i32 : i32 to vector<2x8xi32>
    %9 = arith.muli %6, %8 : vector<2x8xi32>
    %10 = arith.cmpi sge, %7, %9 : vector<2x8xi32>
    %c4_i32_8 = arith.constant 4 : i32
    %11 = vector.broadcast %c4_i32_8 : i32 to vector<2x8xi32>
    %12 = arith.addi %9, %11 : vector<2x8xi32>
    %13 = arith.cmpi slt, %7, %12 : vector<2x8xi32>
    %14 = arith.andi %10, %13 : vector<2x8xi1>
    %15 = arith.extui %14 : vector<2x8xi1> to vector<2x8xi32>
    %16 = arith.sitofp %15 : vector<2x8xi32> to vector<2x8xf32>
    %17 = tpu.iota {dimensions = array<i32: 1>} : vector<8x2xi32>
    %18 = tpu.iota {dimensions = array<i32: 0>} : vector<8x2xi32>
    %c4_i32_9 = arith.constant 4 : i32
    %19 = vector.broadcast %c4_i32_9 : i32 to vector<8x2xi32>
    %20 = arith.muli %17, %19 : vector<8x2xi32>
    %21 = arith.cmpi sge, %18, %20 : vector<8x2xi32>
    %c4_i32_10 = arith.constant 4 : i32
    %22 = vector.broadcast %c4_i32_10 : i32 to vector<8x2xi32>
    %23 = arith.addi %20, %22 : vector<8x2xi32>
    %24 = arith.cmpi slt, %18, %23 : vector<8x2xi32>
    %25 = arith.andi %21, %24 : vector<8x2xi1>
    %26 = arith.extui %25 : vector<8x2xi1> to vector<8x2xi32>
    %27 = arith.sitofp %26 : vector<8x2xi32> to vector<8x2xf32>
    %28 = tpu.iota {dimensions = array<i32: 0>} : vector<4x16xi32>
    %29 = tpu.iota {dimensions = array<i32: 1>} : vector<4x16xi32>
    %c4_i32_11 = arith.constant 4 : i32
    %30 = vector.broadcast %c4_i32_11 : i32 to vector<4x16xi32>
    %31 = arith.muli %28, %30 : vector<4x16xi32>
    %32 = arith.cmpi sge, %29, %31 : vector<4x16xi32>
    %c4_i32_12 = arith.constant 4 : i32
    %33 = vector.broadcast %c4_i32_12 : i32 to vector<4x16xi32>
    %34 = arith.addi %31, %33 : vector<4x16xi32>
    %35 = arith.cmpi slt, %29, %34 : vector<4x16xi32>
    %36 = arith.andi %32, %35 : vector<4x16xi1>
    %37 = arith.extui %36 : vector<4x16xi1> to vector<4x16xi32>
    %38 = arith.sitofp %37 : vector<4x16xi32> to vector<4x16xf32>
    %39 = tpu.iota {dimensions = array<i32: 1>} : vector<16x4xi32>
    %40 = tpu.iota {dimensions = array<i32: 0>} : vector<16x4xi32>
    %c4_i32_13 = arith.constant 4 : i32
    %41 = vector.broadcast %c4_i32_13 : i32 to vector<16x4xi32>
    %42 = arith.muli %39, %41 : vector<16x4xi32>
    %43 = arith.cmpi sge, %40, %42 : vector<16x4xi32>
    %c4_i32_14 = arith.constant 4 : i32
    %44 = vector.broadcast %c4_i32_14 : i32 to vector<16x4xi32>
    %45 = arith.addi %42, %44 : vector<16x4xi32>
    %46 = arith.cmpi slt, %40, %45 : vector<16x4xi32>
    %47 = arith.andi %43, %46 : vector<16x4xi1>
    %48 = arith.extui %47 : vector<16x4xi1> to vector<16x4xi32>
    %49 = arith.sitofp %48 : vector<16x4xi32> to vector<16x4xf32>
    %50 = tpu.iota {dimensions = array<i32: 0>} : vector<4x16xi32>
    %51 = tpu.iota {dimensions = array<i32: 1>} : vector<4x16xi32>
    %c4_i32_15 = arith.constant 4 : i32
    %52 = vector.broadcast %c4_i32_15 : i32 to vector<4x16xi32>
    %53 = arith.muli %50, %52 : vector<4x16xi32>
    %54 = arith.cmpi sge, %51, %53 : vector<4x16xi32>
    %c4_i32_16 = arith.constant 4 : i32
    %55 = vector.broadcast %c4_i32_16 : i32 to vector<4x16xi32>
    %56 = arith.addi %53, %55 : vector<4x16xi32>
    %57 = arith.cmpi slt, %51, %56 : vector<4x16xi32>
    %58 = arith.andi %54, %57 : vector<4x16xi1>
    %59 = arith.extui %58 : vector<4x16xi1> to vector<4x16xi32>
    %60 = arith.sitofp %59 : vector<4x16xi32> to vector<4x16xf32>
    %61 = tpu.iota {dimensions = array<i32: 1>} : vector<16x4xi32>
    %62 = tpu.iota {dimensions = array<i32: 0>} : vector<16x4xi32>
    %c4_i32_17 = arith.constant 4 : i32
    %63 = vector.broadcast %c4_i32_17 : i32 to vector<16x4xi32>
    %64 = arith.muli %61, %63 : vector<16x4xi32>
    %65 = arith.cmpi sge, %62, %64 : vector<16x4xi32>
    %c4_i32_18 = arith.constant 4 : i32
    %66 = vector.broadcast %c4_i32_18 : i32 to vector<16x4xi32>
    %67 = arith.addi %64, %66 : vector<16x4xi32>
    %68 = arith.cmpi slt, %62, %67 : vector<16x4xi32>
    %69 = arith.andi %65, %68 : vector<16x4xi1>
    %70 = arith.extui %69 : vector<16x4xi1> to vector<16x4xi32>
    %71 = arith.sitofp %70 : vector<16x4xi32> to vector<16x4xf32>
    %72 = tpu.iota {dimensions = array<i32: 1>} : vector<8x256xi32>
    %c15_i32 = arith.constant 15 : i32
    %73 = vector.broadcast %c15_i32 : i32 to vector<8x256xi32>
    %74 = arith.andi %72, %73 : vector<8x256xi32>
    %c16_i32 = arith.constant 16 : i32
    %75 = vector.broadcast %c16_i32 : i32 to vector<8x256xi32>
    %76 = arith.cmpi sge, %72, %75 : vector<8x256xi32>
    %c240_i32 = arith.constant 240 : i32
    %77 = vector.broadcast %c240_i32 : i32 to vector<8x256xi32>
    %78 = arith.cmpi slt, %72, %77 : vector<8x256xi32>
    %c1_i32 = arith.constant 1 : i32
    %79 = vector.broadcast %c1_i32 : i32 to vector<8x256xi32>
    %80 = arith.cmpi sge, %74, %79 : vector<8x256xi32>
    %c14_i32 = arith.constant 14 : i32
    %81 = vector.broadcast %c14_i32 : i32 to vector<8x256xi32>
    %82 = arith.cmpi sle, %74, %81 : vector<8x256xi32>
    %83 = arith.andi %76, %80 : vector<8x256xi1>
    %84 = arith.andi %76, %82 : vector<8x256xi1>
    %85 = arith.andi %78, %80 : vector<8x256xi1>
    %86 = arith.andi %78, %82 : vector<8x256xi1>
    %c0_19 = arith.constant 0 : index
    %c0_20 = arith.constant 0 : index
    %c0_21 = arith.constant 0 : index
    %87 = vector.load %arg1[%c0_19, %c0_20, %c0_21] : memref<1x4x256xbf16, #tpu.memory_space<vmem>>, vector<1x4x256xbf16>
    %88 = vector.shape_cast %87 : vector<1x4x256xbf16> to vector<4x256xbf16>
    %c0_22 = arith.constant 0 : index
    %c0_23 = arith.constant 0 : index
    %89 = vector.load %arg2[%c0_22, %c0_23] : memref<8x4xbf16, #tpu.memory_space<vmem>>, vector<8x4xbf16>
    %cst = arith.constant dense<0.000000e+00> : vector<8x256xf32>
    %90 = tpu.matmul %89, %88, %cst {dimension_numbers = #tpu.dot_dimension_numbers<[1], [0], [0], [1], [0, 0, 1, 1], [], []>} : vector<8x4xbf16>, vector<4x256xbf16>, vector<8x256xf32> -> vector<8x256xf32>
    %cst_24 = arith.constant dense<0.000000e+00> : vector<8xf32>
    %91 = vector.multi_reduction <add>, %90, %cst_24 [1] : vector<8x256xf32> to vector<8xf32>
    %92 = vector.shape_cast %91 : vector<8xf32> to vector<8x1xf32>
    %93 = arith.mulf %90, %90 : vector<8x256xf32>
    %cst_25 = arith.constant dense<0.000000e+00> : vector<8xf32>
    %94 = vector.multi_reduction <add>, %93, %cst_25 [1] : vector<8x256xf32> to vector<8xf32>
    %95 = vector.shape_cast %94 : vector<8xf32> to vector<8x1xf32>
    %96 = tpu.concatenate %92, %95 in 1 : vector<8x1xf32>, vector<8x1xf32> -> vector<8x2xf32>
    %cst_26 = arith.constant dense<0.000000e+00> : vector<2x2xf32>
    %97 = tpu.matmul %16, %96, %cst_26 {dimension_numbers = #tpu.dot_dimension_numbers<[1], [0], [0], [1], [0, 0, 1, 1], [], []>} : vector<2x8xf32>, vector<8x2xf32>, vector<2x2xf32> -> vector<2x2xf32>
    %cst_27 = arith.constant 9.765625E-4 : f32
    %98 = vector.broadcast %cst_27 : f32 to vector<2x2xf32>
    %99 = arith.mulf %97, %98 : vector<2x2xf32>
    %100 = vector.extract_strided_slice %99 {offsets = [0, 0], sizes = [2, 1], strides = [1, 1]} : vector<2x2xf32> to vector<2x1xf32>
    %101 = vector.extract_strided_slice %99 {offsets = [0, 1], sizes = [2, 1], strides = [1, 1]} : vector<2x2xf32> to vector<2x1xf32>
    %102 = arith.mulf %100, %100 : vector<2x1xf32>
    %103 = arith.subf %101, %102 : vector<2x1xf32>
    %cst_28 = arith.constant 0.000000e+00 : f32
    %104 = vector.broadcast %cst_28 : f32 to vector<2x1xf32>
    %105 = arith.maximumf %103, %104 : vector<2x1xf32>
    %cst_29 = arith.constant 9.99999974E-6 : f32
    %106 = vector.broadcast %cst_29 : f32 to vector<2x1xf32>
    %107 = arith.addf %105, %106 : vector<2x1xf32>
    %108 = math.rsqrt %107 : vector<2x1xf32>
    %109 = tpu.concatenate %100, %108 in 1 : vector<2x1xf32>, vector<2x1xf32> -> vector<2x2xf32>
    %cst_30 = arith.constant dense<0.000000e+00> : vector<8x2xf32>
    %110 = tpu.matmul %27, %109, %cst_30 {dimension_numbers = #tpu.dot_dimension_numbers<[1], [0], [0], [1], [0, 0, 1, 1], [], []>} : vector<8x2xf32>, vector<2x2xf32>, vector<8x2xf32> -> vector<8x2xf32>
    %111 = vector.extract_strided_slice %110 {offsets = [0, 1], sizes = [8, 1], strides = [1, 1]} : vector<8x2xf32> to vector<8x1xf32>
    %112 = arith.mulf %111, %0 : vector<8x1xf32>
    %113 = vector.extract_strided_slice %110 {offsets = [0, 0], sizes = [8, 1], strides = [1, 1]} : vector<8x2xf32> to vector<8x1xf32>
    %114 = arith.mulf %113, %112 : vector<8x1xf32>
    %115 = arith.subf %1, %114 : vector<8x1xf32>
    %116 = vector.broadcast %112 : vector<8x1xf32> to vector<8x256xf32>
    %117 = arith.mulf %90, %116 : vector<8x256xf32>
    %118 = vector.broadcast %115 : vector<8x1xf32> to vector<8x256xf32>
    %119 = arith.addf %117, %118 : vector<8x256xf32>
    %cst_31 = arith.constant 5.000000e-01 : f32
    %120 = vector.broadcast %cst_31 : f32 to vector<8x256xf32>
    %121 = arith.mulf %120, %119 : vector<8x256xf32>
    %cst_32 = arith.constant 0.707106769 : f32
    %122 = vector.broadcast %cst_32 : f32 to vector<8x256xf32>
    %123 = arith.mulf %119, %122 : vector<8x256xf32>
    %124 = math.erf %123 : vector<8x256xf32>
    %cst_33 = arith.constant 1.000000e+00 : f32
    %125 = vector.broadcast %cst_33 : f32 to vector<8x256xf32>
    %126 = arith.addf %125, %124 : vector<8x256xf32>
    %127 = arith.mulf %121, %126 : vector<8x256xf32>
    %128 = arith.truncf %127 : vector<8x256xf32> to vector<8x256xbf16>
    %c0_34 = arith.constant 0 : index
    %c0_35 = arith.constant 0 : index
    %129 = vector.load %arg3[%c0_34, %c0_35] : memref<16x8xbf16, #tpu.memory_space<vmem>>, vector<16x8xbf16>
    %cst_36 = arith.constant dense<0.000000e+00> : vector<16x256xf32>
    %130 = tpu.matmul %129, %128, %cst_36 {dimension_numbers = #tpu.dot_dimension_numbers<[1], [0], [0], [1], [0, 0, 1, 1], [], []>} : vector<16x8xbf16>, vector<8x256xbf16>, vector<16x256xf32> -> vector<16x256xf32>
    %cst_37 = arith.constant dense<0.000000e+00> : vector<16xf32>
    %131 = vector.multi_reduction <add>, %130, %cst_37 [1] : vector<16x256xf32> to vector<16xf32>
    %132 = vector.shape_cast %131 : vector<16xf32> to vector<16x1xf32>
    %133 = arith.mulf %130, %130 : vector<16x256xf32>
    %cst_38 = arith.constant dense<0.000000e+00> : vector<16xf32>
    %134 = vector.multi_reduction <add>, %133, %cst_38 [1] : vector<16x256xf32> to vector<16xf32>
    %135 = vector.shape_cast %134 : vector<16xf32> to vector<16x1xf32>
    %136 = tpu.concatenate %132, %135 in 1 : vector<16x1xf32>, vector<16x1xf32> -> vector<16x2xf32>
    %cst_39 = arith.constant dense<0.000000e+00> : vector<4x2xf32>
    %137 = tpu.matmul %38, %136, %cst_39 {dimension_numbers = #tpu.dot_dimension_numbers<[1], [0], [0], [1], [0, 0, 1, 1], [], []>} : vector<4x16xf32>, vector<16x2xf32>, vector<4x2xf32> -> vector<4x2xf32>
    %cst_40 = arith.constant 9.765625E-4 : f32
    %138 = vector.broadcast %cst_40 : f32 to vector<4x2xf32>
    %139 = arith.mulf %137, %138 : vector<4x2xf32>
    %140 = vector.extract_strided_slice %139 {offsets = [0, 0], sizes = [4, 1], strides = [1, 1]} : vector<4x2xf32> to vector<4x1xf32>
    %141 = vector.extract_strided_slice %139 {offsets = [0, 1], sizes = [4, 1], strides = [1, 1]} : vector<4x2xf32> to vector<4x1xf32>
    %142 = arith.mulf %140, %140 : vector<4x1xf32>
    %143 = arith.subf %141, %142 : vector<4x1xf32>
    %cst_41 = arith.constant 0.000000e+00 : f32
    %144 = vector.broadcast %cst_41 : f32 to vector<4x1xf32>
    %145 = arith.maximumf %143, %144 : vector<4x1xf32>
    %cst_42 = arith.constant 9.99999974E-6 : f32
    %146 = vector.broadcast %cst_42 : f32 to vector<4x1xf32>
    %147 = arith.addf %145, %146 : vector<4x1xf32>
    %148 = math.rsqrt %147 : vector<4x1xf32>
    %149 = tpu.concatenate %140, %148 in 1 : vector<4x1xf32>, vector<4x1xf32> -> vector<4x2xf32>
    %cst_43 = arith.constant dense<0.000000e+00> : vector<16x2xf32>
    %150 = tpu.matmul %49, %149, %cst_43 {dimension_numbers = #tpu.dot_dimension_numbers<[1], [0], [0], [1], [0, 0, 1, 1], [], []>} : vector<16x4xf32>, vector<4x2xf32>, vector<16x2xf32> -> vector<16x2xf32>
    %151 = vector.extract_strided_slice %150 {offsets = [0, 1], sizes = [16, 1], strides = [1, 1]} : vector<16x2xf32> to vector<16x1xf32>
    %152 = arith.mulf %151, %2 : vector<16x1xf32>
    %153 = vector.extract_strided_slice %150 {offsets = [0, 0], sizes = [16, 1], strides = [1, 1]} : vector<16x2xf32> to vector<16x1xf32>
    %154 = arith.mulf %153, %152 : vector<16x1xf32>
    %155 = arith.subf %3, %154 : vector<16x1xf32>
    %156 = vector.broadcast %152 : vector<16x1xf32> to vector<16x256xf32>
    %157 = arith.mulf %130, %156 : vector<16x256xf32>
    %158 = vector.broadcast %155 : vector<16x1xf32> to vector<16x256xf32>
    %159 = arith.addf %157, %158 : vector<16x256xf32>
    %cst_44 = arith.constant 5.000000e-01 : f32
    %160 = vector.broadcast %cst_44 : f32 to vector<16x256xf32>
    %161 = arith.mulf %160, %159 : vector<16x256xf32>
    %cst_45 = arith.constant 0.707106769 : f32
    %162 = vector.broadcast %cst_45 : f32 to vector<16x256xf32>
    %163 = arith.mulf %159, %162 : vector<16x256xf32>
    %164 = math.erf %163 : vector<16x256xf32>
    %cst_46 = arith.constant 1.000000e+00 : f32
    %165 = vector.broadcast %cst_46 : f32 to vector<16x256xf32>
    %166 = arith.addf %165, %164 : vector<16x256xf32>
    %167 = arith.mulf %161, %166 : vector<16x256xf32>
    %c0_47 = arith.constant 0 : index
    %c0_48 = arith.constant 0 : index
    %c0_49 = arith.constant 0 : index
    %168 = vector.load %arg6[%c0_47, %c0_48, %c0_49] : memref<1x32x256xf32, #tpu.memory_space<vmem>>, vector<1x16x256xf32>
    %169 = vector.shape_cast %168 : vector<1x16x256xf32> to vector<16x256xf32>
    %170 = vector.shape_cast %167 : vector<16x256xf32> to vector<1x16x256xf32>
    tpu.vector_store %arg6[%c0_47, %c0_48, %c0_49], %170 {strides = array<i32>} : memref<1x32x256xf32, #tpu.memory_space<vmem>>, vector<1x16x256xf32>,
    %c17_i32 = arith.constant 17 : i32
    %171 = tpu.dynamic_rotate %127 by %c17_i32 dim 1 : vector<8x256xf32>, i32 -> vector<8x256xf32>
    %cst_50 = arith.constant 0.000000e+00 : f32
    %172 = vector.broadcast %cst_50 : f32 to vector<8x256xf32>
    %173 = arith.select %83, %171, %172 : vector<8x256xi1>, vector<8x256xf32>
    %c0_51 = arith.constant 0 : index
    %c0_52 = arith.constant 0 : index
    %174 = vector.load %arg7[%c0_51, %c0_52] : memref<72x256xf32, #tpu.memory_space<vmem>>, vector<8x256xf32>
    tpu.vector_store %arg7[%c0_51, %c0_52], %173 {strides = array<i32>} : memref<72x256xf32, #tpu.memory_space<vmem>>, vector<8x256xf32>,
    %c16_i32_53 = arith.constant 16 : i32
    %175 = tpu.dynamic_rotate %127 by %c16_i32_53 dim 1 : vector<8x256xf32>, i32 -> vector<8x256xf32>
    %cst_54 = arith.constant 0.000000e+00 : f32
    %176 = vector.broadcast %cst_54 : f32 to vector<8x256xf32>
    %177 = arith.select %76, %175, %176 : vector<8x256xi1>, vector<8x256xf32>
    %c8_55 = arith.constant 8 : index
    %c0_56 = arith.constant 0 : index
    %178 = vector.load %arg7[%c8_55, %c0_56] : memref<72x256xf32, #tpu.memory_space<vmem>>, vector<8x256xf32>
    tpu.vector_store %arg7[%c8_55, %c0_56], %177 {strides = array<i32>} : memref<72x256xf32, #tpu.memory_space<vmem>>, vector<8x256xf32>,
    %c15_i32_57 = arith.constant 15 : i32
    %179 = tpu.dynamic_rotate %127 by %c15_i32_57 dim 1 : vector<8x256xf32>, i32 -> vector<8x256xf32>
    %cst_58 = arith.constant 0.000000e+00 : f32
    %180 = vector.broadcast %cst_58 : f32 to vector<8x256xf32>
    %181 = arith.select %84, %179, %180 : vector<8x256xi1>, vector<8x256xf32>
    %c16 = arith.constant 16 : index
    %c0_59 = arith.constant 0 : index
    %182 = vector.load %arg7[%c16, %c0_59] : memref<72x256xf32, #tpu.memory_space<vmem>>, vector<8x256xf32>
    tpu.vector_store %arg7[%c16, %c0_59], %181 {strides = array<i32>} : memref<72x256xf32, #tpu.memory_space<vmem>>, vector<8x256xf32>,
    %c1_i32_60 = arith.constant 1 : i32
    %183 = tpu.dynamic_rotate %127 by %c1_i32_60 dim 1 : vector<8x256xf32>, i32 -> vector<8x256xf32>
    %cst_61 = arith.constant 0.000000e+00 : f32
    %184 = vector.broadcast %cst_61 : f32 to vector<8x256xf32>
    %185 = arith.select %80, %183, %184 : vector<8x256xi1>, vector<8x256xf32>
    %c24_62 = arith.constant 24 : index
    %c0_63 = arith.constant 0 : index
    %186 = vector.load %arg7[%c24_62, %c0_63] : memref<72x256xf32, #tpu.memory_space<vmem>>, vector<8x256xf32>
    tpu.vector_store %arg7[%c24_62, %c0_63], %185 {strides = array<i32>} : memref<72x256xf32, #tpu.memory_space<vmem>>, vector<8x256xf32>,
    %c32 = arith.constant 32 : index
    %c0_64 = arith.constant 0 : index
    %187 = vector.load %arg7[%c32, %c0_64] : memref<72x256xf32, #tpu.memory_space<vmem>>, vector<8x256xf32>
    tpu.vector_store %arg7[%c32, %c0_64], %127 {strides = array<i32>} : memref<72x256xf32, #tpu.memory_space<vmem>>, vector<8x256xf32>,
    %c255_i32 = arith.constant 255 : i32
    %188 = tpu.dynamic_rotate %127 by %c255_i32 dim 1 : vector<8x256xf32>, i32 -> vector<8x256xf32>
    %cst_65 = arith.constant 0.000000e+00 : f32
    %189 = vector.broadcast %cst_65 : f32 to vector<8x256xf32>
    %190 = arith.select %82, %188, %189 : vector<8x256xi1>, vector<8x256xf32>
    %c40 = arith.constant 40 : index
    %c0_66 = arith.constant 0 : index
    %191 = vector.load %arg7[%c40, %c0_66] : memref<72x256xf32, #tpu.memory_space<vmem>>, vector<8x256xf32>
    tpu.vector_store %arg7[%c40, %c0_66], %190 {strides = array<i32>} : memref<72x256xf32, #tpu.memory_space<vmem>>, vector<8x256xf32>,
    %c241_i32 = arith.constant 241 : i32
    %192 = tpu.dynamic_rotate %127 by %c241_i32 dim 1 : vector<8x256xf32>, i32 -> vector<8x256xf32>
    %cst_67 = arith.constant 0.000000e+00 : f32
    %193 = vector.broadcast %cst_67 : f32 to vector<8x256xf32>
    %194 = arith.select %85, %192, %193 : vector<8x256xi1>, vector<8x256xf32>
    %c48 = arith.constant 48 : index
    %c0_68 = arith.constant 0 : index
    %195 = vector.load %arg7[%c48, %c0_68] : memref<72x256xf32, #tpu.memory_space<vmem>>, vector<8x256xf32>
    tpu.vector_store %arg7[%c48, %c0_68], %194 {strides = array<i32>} : memref<72x256xf32, #tpu.memory_space<vmem>>, vector<8x256xf32>,
    %c240_i32_69 = arith.constant 240 : i32
    %196 = tpu.dynamic_rotate %127 by %c240_i32_69 dim 1 : vector<8x256xf32>, i32 -> vector<8x256xf32>
    %cst_70 = arith.constant 0.000000e+00 : f32
    %197 = vector.broadcast %cst_70 : f32 to vector<8x256xf32>
    %198 = arith.select %78, %196, %197 : vector<8x256xi1>, vector<8x256xf32>
    %c56 = arith.constant 56 : index
    %c0_71 = arith.constant 0 : index
    %199 = vector.load %arg7[%c56, %c0_71] : memref<72x256xf32, #tpu.memory_space<vmem>>, vector<8x256xf32>
    tpu.vector_store %arg7[%c56, %c0_71], %198 {strides = array<i32>} : memref<72x256xf32, #tpu.memory_space<vmem>>, vector<8x256xf32>,
    %c239_i32 = arith.constant 239 : i32
    %200 = tpu.dynamic_rotate %127 by %c239_i32 dim 1 : vector<8x256xf32>, i32 -> vector<8x256xf32>
    %cst_72 = arith.constant 0.000000e+00 : f32
    %201 = vector.broadcast %cst_72 : f32 to vector<8x256xf32>
    %202 = arith.select %86, %200, %201 : vector<8x256xi1>, vector<8x256xf32>
    %c64 = arith.constant 64 : index
    %c0_73 = arith.constant 0 : index
    %203 = vector.load %arg7[%c64, %c0_73] : memref<72x256xf32, #tpu.memory_space<vmem>>, vector<8x256xf32>
    tpu.vector_store %arg7[%c64, %c0_73], %202 {strides = array<i32>} : memref<72x256xf32, #tpu.memory_space<vmem>>, vector<8x256xf32>,
    %c0_74 = arith.constant 0 : index
    %c0_75 = arith.constant 0 : index
    %204 = vector.load %arg4[%c0_74, %c0_75] : memref<16x72xbf16, #tpu.memory_space<vmem>>, vector<16x72xbf16>
    %c0_76 = arith.constant 0 : index
    %c0_77 = arith.constant 0 : index
    %205 = vector.load %arg7[%c0_76, %c0_77] : memref<72x256xf32, #tpu.memory_space<vmem>>, vector<72x256xf32>
    %206 = arith.truncf %205 : vector<72x256xf32> to vector<72x256xbf16>
    %cst_78 = arith.constant dense<0.000000e+00> : vector<16x256xf32>
    %207 = tpu.matmul %204, %206, %cst_78 {dimension_numbers = #tpu.dot_dimension_numbers<[1], [0], [0], [1], [0, 0, 1, 1], [], []>} : vector<16x72xbf16>, vector<72x256xbf16>, vector<16x256xf32> -> vector<16x256xf32>
    %cst_79 = arith.constant dense<0.000000e+00> : vector<16xf32>
    %208 = vector.multi_reduction <add>, %207, %cst_79 [1] : vector<16x256xf32> to vector<16xf32>
    %209 = vector.shape_cast %208 : vector<16xf32> to vector<16x1xf32>
    %210 = arith.mulf %207, %207 : vector<16x256xf32>
    %cst_80 = arith.constant dense<0.000000e+00> : vector<16xf32>
    %211 = vector.multi_reduction <add>, %210, %cst_80 [1] : vector<16x256xf32> to vector<16xf32>
    %212 = vector.shape_cast %211 : vector<16xf32> to vector<16x1xf32>
    %213 = tpu.concatenate %209, %212 in 1 : vector<16x1xf32>, vector<16x1xf32> -> vector<16x2xf32>
    %cst_81 = arith.constant dense<0.000000e+00> : vector<4x2xf32>
    %214 = tpu.matmul %60, %213, %cst_81 {dimension_numbers = #tpu.dot_dimension_numbers<[1], [0], [0], [1], [0, 0, 1, 1], [], []>} : vector<4x16xf32>, vector<16x2xf32>, vector<4x2xf32> -> vector<4x2xf32>
    %cst_82 = arith.constant 9.765625E-4 : f32
    %215 = vector.broadcast %cst_82 : f32 to vector<4x2xf32>
    %216 = arith.mulf %214, %215 : vector<4x2xf32>
    %217 = vector.extract_strided_slice %216 {offsets = [0, 0], sizes = [4, 1], strides = [1, 1]} : vector<4x2xf32> to vector<4x1xf32>
    %218 = vector.extract_strided_slice %216 {offsets = [0, 1], sizes = [4, 1], strides = [1, 1]} : vector<4x2xf32> to vector<4x1xf32>
    %219 = arith.mulf %217, %217 : vector<4x1xf32>
    %220 = arith.subf %218, %219 : vector<4x1xf32>
    %cst_83 = arith.constant 0.000000e+00 : f32
    %221 = vector.broadcast %cst_83 : f32 to vector<4x1xf32>
    %222 = arith.maximumf %220, %221 : vector<4x1xf32>
    %cst_84 = arith.constant 9.99999974E-6 : f32
    %223 = vector.broadcast %cst_84 : f32 to vector<4x1xf32>
    %224 = arith.addf %222, %223 : vector<4x1xf32>
    %225 = math.rsqrt %224 : vector<4x1xf32>
    %226 = tpu.concatenate %217, %225 in 1 : vector<4x1xf32>, vector<4x1xf32> -> vector<4x2xf32>
    %cst_85 = arith.constant dense<0.000000e+00> : vector<16x2xf32>
    %227 = tpu.matmul %71, %226, %cst_85 {dimension_numbers = #tpu.dot_dimension_numbers<[1], [0], [0], [1], [0, 0, 1, 1], [], []>} : vector<16x4xf32>, vector<4x2xf32>, vector<16x2xf32> -> vector<16x2xf32>
    %228 = vector.extract_strided_slice %227 {offsets = [0, 1], sizes = [16, 1], strides = [1, 1]} : vector<16x2xf32> to vector<16x1xf32>
    %229 = arith.mulf %228, %4 : vector<16x1xf32>
    %230 = vector.extract_strided_slice %227 {offsets = [0, 0], sizes = [16, 1], strides = [1, 1]} : vector<16x2xf32> to vector<16x1xf32>
    %231 = arith.mulf %230, %229 : vector<16x1xf32>
    %232 = arith.subf %5, %231 : vector<16x1xf32>
    %233 = vector.broadcast %229 : vector<16x1xf32> to vector<16x256xf32>
    %234 = arith.mulf %207, %233 : vector<16x256xf32>
    %235 = vector.broadcast %232 : vector<16x1xf32> to vector<16x256xf32>
    %236 = arith.addf %234, %235 : vector<16x256xf32>
    %cst_86 = arith.constant 5.000000e-01 : f32
    %237 = vector.broadcast %cst_86 : f32 to vector<16x256xf32>
    %238 = arith.mulf %237, %236 : vector<16x256xf32>
    %cst_87 = arith.constant 0.707106769 : f32
    %239 = vector.broadcast %cst_87 : f32 to vector<16x256xf32>
    %240 = arith.mulf %236, %239 : vector<16x256xf32>
    %241 = math.erf %240 : vector<16x256xf32>
    %cst_88 = arith.constant 1.000000e+00 : f32
    %242 = vector.broadcast %cst_88 : f32 to vector<16x256xf32>
    %243 = arith.addf %242, %241 : vector<16x256xf32>
    %244 = arith.mulf %238, %243 : vector<16x256xf32>
    %c0_89 = arith.constant 0 : index
    %c16_90 = arith.constant 16 : index
    %c0_91 = arith.constant 0 : index
    %245 = vector.load %arg6[%c0_89, %c16_90, %c0_91] : memref<1x32x256xf32, #tpu.memory_space<vmem>>, vector<1x16x256xf32>
    %246 = vector.shape_cast %245 : vector<1x16x256xf32> to vector<16x256xf32>
    %247 = vector.shape_cast %244 : vector<16x256xf32> to vector<1x16x256xf32>
    tpu.vector_store %arg6[%c0_89, %c16_90, %c0_91], %247 {strides = array<i32>} : memref<1x32x256xf32, #tpu.memory_space<vmem>>, vector<1x16x256xf32>,
    return
  }
  func.func @transform_0(%arg0: i32) -> (i32, i32, i32) {
    %c0_i32 = arith.constant 0 : i32
    %c0_i32_0 = arith.constant 0 : i32
    %c0_i32_1 = arith.constant 0 : i32
    return %arg0, %c0_i32, %c0_i32_0 : i32, i32, i32
  }
  func.func @transform_1(%arg0: i32) -> (i32, i32) {
    %c0_i32 = arith.constant 0 : i32
    %c0_i32_0 = arith.constant 0 : i32
    %c0_i32_1 = arith.constant 0 : i32
    return %c0_i32, %c0_i32_0 : i32, i32
  }
  func.func @transform_2(%arg0: i32) -> (i32, i32) {
    %c0_i32 = arith.constant 0 : i32
    %c0_i32_0 = arith.constant 0 : i32
    %c0_i32_1 = arith.constant 0 : i32
    return %c0_i32, %c0_i32_0 : i32, i32
  }
  func.func @transform_3(%arg0: i32) -> (i32, i32) {
    %c0_i32 = arith.constant 0 : i32
    %c0_i32_0 = arith.constant 0 : i32
    %c0_i32_1 = arith.constant 0 : i32
    return %c0_i32, %c0_i32_0 : i32, i32
  }
  func.func @transform_4(%arg0: i32) -> (i32, i32) {
    %c0_i32 = arith.constant 0 : i32
    %c0_i32_0 = arith.constant 0 : i32
    %c0_i32_1 = arith.constant 0 : i32
    return %c0_i32, %c0_i32_0 : i32, i32
  }
  func.func @transform_5(%arg0: i32) -> (i32, i32, i32) {
    %c0_i32 = arith.constant 0 : i32
    %c0_i32_0 = arith.constant 0 : i32
    %c0_i32_1 = arith.constant 0 : i32
    return %arg0, %c0_i32, %c0_i32_0 : i32, i32, i32
  }
}

</mosaic_0001>

<llo_original>
// kernel: tpu_custom_call.1
$region0: #{tpu_custom_call.1}
  #allocation0 [shape = 'u32[]', space=smem, size = 0x4, offset = 0x4, fixed_abs, tag = 'smem constant byte address 0x4 - core index']
  #allocation1 [shape = 'u32[72,128]{1,0:T(1,128)}', space=vmem, size = 0x9000, scoped, tag = 'internal scratch']
  #allocation2 [shape = 'f32[72,256]{1,0:T(8,128)}', space=vmem, size = 0x12000, scoped, tag = 'scratch operand']
  %s0 = inlined_call_operand.vmem [shape: bf16[2,4,256], index: 0, kind: input, shape index: {}]
  %s1 = inlined_call_operand.vmem [shape: bf16[8,4], index: 1, kind: input, shape index: {}]
  %s2 = inlined_call_operand.vmem [shape: bf16[16,8], index: 2, kind: input, shape index: {}]
  %s3 = inlined_call_operand.vmem [shape: bf16[16,72], index: 3, kind: input, shape index: {}]
  %s4 = inlined_call_operand.vmem [shape: f32[40,2], index: 4, kind: input, shape index: {}]
  %s5 = inlined_call_operand.hbm [shape: f32[2,32,256], index: 5, kind: output, shape index: {}]
  %s6 = sld [smem:[#allocation0]]
  $region53: #{tpu_custom_call.1} parent=0
    _
  %s8 = ssub.s32 1, %s6
  %s9 = scalar_select 0, %s8, %s6
  $region1: #{tpu_custom_call.1} parent=0
    #allocation3 [shape = 'u8[65536]{0}', space=vmem, size = 0x10000, scoped, tag = 'output window, operand 0']
    #allocation4 [shape = 's32[2]{0}', space=sflag, size = 0x8, scoped, tag = 'scoped memory for tpu_custom_call.1']
    %10 = vsyncpa [#allocation4], 0
    %s11 = scalar_lea.sflag [#allocation4], 1
    %12 = vsyncpa %s11, 0
    loop: start=0, step=1, limit=4
    $region2: #{tpu_custom_call.1} parent=1 // loop_pre_header
      _
    $region3: #{tpu_custom_call.1} parent=1 // loop_header
      %s14 = sphi 0, %s18
      %p15 = scmp.ge.s32.totalorder %s14, 4
      %s24 = sphi 0, %s26
      %s27 = sphi 0, %s24
      %s28 = sphi 0, %s27
      %s44 = sphi 0, %s28
      %s48 = sphi 0, %s48
      %s50 = sphi 0, %s48
      %s51 = sphi 0, %s50
      %s65 = sphi 0, %s51
      %s69 = sphi 0, %s69
      %s71 = sphi 0, %s69
      %s72 = sphi 0, %s71
      %s86 = sphi 0, %s72
      %s90 = sphi 0, %s90
      %s92 = sphi 0, %s90
      %s93 = sphi 0, %s92
      %s107 = sphi 0, %s93
      %s111 = sphi 0, %s111
      %s113 = sphi 0, %s111
      %s114 = sphi 0, %s113
      %s128 = sphi 0, %s114
      %s134 = sphi 0, %s136
      %s137 = sphi 0, %s134
      %s138 = sphi 0, %s137
      %s154 = sphi 0, %s138
    $region4: #{tpu_custom_call.1} parent=1 // loop_header_branch
      %17 = sbr.rel (%p15) target = $region8
    $region5: #{tpu_custom_call.1} parent=1 // loop_body
      %s19 = ssub.s32 %s14, 1
      %s20 = ssub.s32 %s14, 2
      %s21 = sadd.s32 %s14, 1
      %s22 = ssub.s32 %s14, %s21
      %p23 = scmp.eq.s32.totalorder %s22, 0
      %s25 = sadd.s32 %s24, 1
      %s26 = scalar_select %p23, %s24, %s25
      %p29 = pneg %p23
      %p30 = scmp.eq.s32.totalorder %s14, 1
      %p31 = por %p29, %p30
      %p32 = scmp.ne.s32.totalorder %s24, %s27
      %p33 = scmp.eq.s32.totalorder %s14, 0
      %p34 = por %p32, %p33
      %p35 = scmp.ne.s32.totalorder %s24, %s27
      %p36 = scmp.eq.s32.totalorder %s19, 1
      %p37 = por %p35, %p36
      %p38 = scmp.ne.s32.totalorder %s27, %s28
      %p39 = scmp.eq.s32.totalorder %s19, 0
      %p40 = por %p38, %p39
      %p41 = scmp.ne.s32.totalorder %s27, %s28
      %p42 = scmp.eq.s32.totalorder %s20, 1
      %p43 = por %p41, %p42
      %p45 = scmp.ne.s32.totalorder %s28, %s44
      %p46 = scmp.eq.s32.totalorder %s20, 0
      %p47 = por %p45, %p46
      %s49 = sadd.s32 %s48, 1
      %p52 = scmp.eq.s32.totalorder %s14, 1
      %p53 = scmp.ne.s32.totalorder %s48, %s50
      %p54 = scmp.eq.s32.totalorder %s14, 0
      %p55 = por %p53, %p54
      %p56 = scmp.ne.s32.totalorder %s48, %s50
      %p57 = scmp.eq.s32.totalorder %s19, 1
      %p58 = por %p56, %p57
      %p59 = scmp.ne.s32.totalorder %s50, %s51
      %p60 = scmp.eq.s32.totalorder %s19, 0
      %p61 = por %p59, %p60
      %p62 = scmp.ne.s32.totalorder %s50, %s51
      %p63 = scmp.eq.s32.totalorder %s20, 1
      %p64 = por %p62, %p63
      %p66 = scmp.ne.s32.totalorder %s51, %s65
      %p67 = scmp.eq.s32.totalorder %s20, 0
      %p68 = por %p66, %p67
      %s70 = sadd.s32 %s69, 1
      %p73 = scmp.eq.s32.totalorder %s14, 1
      %p74 = scmp.ne.s32.totalorder %s69, %s71
      %p75 = scmp.eq.s32.totalorder %s14, 0
      %p76 = por %p74, %p75
      %p77 = scmp.ne.s32.totalorder %s69, %s71
      %p78 = scmp.eq.s32.totalorder %s19, 1
      %p79 = por %p77, %p78
      %p80 = scmp.ne.s32.totalorder %s71, %s72
      %p81 = scmp.eq.s32.totalorder %s19, 0
      %p82 = por %p80, %p81
      %p83 = scmp.ne.s32.totalorder %s71, %s72
      %p84 = scmp.eq.s32.totalorder %s20, 1
      %p85 = por %p83, %p84
      %p87 = scmp.ne.s32.totalorder %s72, %s86
      %p88 = scmp.eq.s32.totalorder %s20, 0
      %p89 = por %p87, %p88
      %s91 = sadd.s32 %s90, 1
      %p94 = scmp.eq.s32.totalorder %s14, 1
      %p95 = scmp.ne.s32.totalorder %s90, %s92
      %p96 = scmp.eq.s32.totalorder %s14, 0
      %p97 = por %p95, %p96
      %p98 = scmp.ne.s32.totalorder %s90, %s92
      %p99 = scmp.eq.s32.totalorder %s19, 1
      %p100 = por %p98, %p99
      %p101 = scmp.ne.s32.totalorder %s92, %s93
      %p102 = scmp.eq.s32.totalorder %s19, 0
      %p103 = por %p101, %p102
      %p104 = scmp.ne.s32.totalorder %s92, %s93
      %p105 = scmp.eq.s32.totalorder %s20, 1
      %p106 = por %p104, %p105
      %p108 = scmp.ne.s32.totalorder %s93, %s107
      %p109 = scmp.eq.s32.totalorder %s20, 0
      %p110 = por %p108, %p109
      %s112 = sadd.s32 %s111, 1
      %p115 = scmp.eq.s32.totalorder %s14, 1
      %p116 = scmp.ne.s32.totalorder %s111, %s113
      %p117 = scmp.eq.s32.totalorder %s14, 0
      %p118 = por %p116, %p117
      %p119 = scmp.ne.s32.totalorder %s111, %s113
      %p120 = scmp.eq.s32.totalorder %s19, 1
      %p121 = por %p119, %p120
      %p122 = scmp.ne.s32.totalorder %s113, %s114
      %p123 = scmp.eq.s32.totalorder %s19, 0
      %p124 = por %p122, %p123
      %p125 = scmp.ne.s32.totalorder %s113, %s114
      %p126 = scmp.eq.s32.totalorder %s20, 1
      %p127 = por %p125, %p126
      %p129 = scmp.ne.s32.totalorder %s114, %s128
      %p130 = scmp.eq.s32.totalorder %s20, 0
      %p131 = por %p129, %p130
      %s132 = ssub.s32 %s14, %s21
      %p133 = scmp.eq.s32.totalorder %s132, 0
      %s135 = sadd.s32 %s134, 1
      %s136 = scalar_select %p133, %s134, %s135
      %p139 = pneg %p133
      %p140 = scmp.eq.s32.totalorder %s14, 1
      %p141 = por %p139, %p140
      %p142 = scmp.ne.s32.totalorder %s134, %s137
      %p143 = scmp.eq.s32.totalorder %s14, 0
      %p144 = por %p142, %p143
      %p145 = scmp.ne.s32.totalorder %s134, %s137
      %p146 = scmp.eq.s32.totalorder %s19, 1
      %p147 = por %p145, %p146
      %p148 = scmp.ne.s32.totalorder %s137, %s138
      %p149 = scmp.eq.s32.totalorder %s19, 0
      %p150 = por %p148, %p149
      %p151 = scmp.ne.s32.totalorder %s137, %s138
      %p152 = scmp.eq.s32.totalorder %s20, 1
      %p153 = por %p151, %p152
      %p155 = scmp.ne.s32.totalorder %s138, %s154
      %p156 = scmp.eq.s32.totalorder %s20, 0
      %p157 = por %p155, %p156
      %p158 = scmp.le.s32.totalorder 1, %s14
      %p159 = scmp.lt.s32.totalorder %s14, 3
      %p160 = pnand %p158, %p159
      %p161 = pneg %p160
      // Predicated region
      $region9: #{tpu_custom_call.1} parent=5 // pred_check
        _
      $region10: #{tpu_custom_call.1} parent=5 // pred_check_branch
        %163 = sbr.rel (%p160) target = $region12
      $region11: #{tpu_custom_call.1} parent=5 // pred_region
        %s164 = ssub.s32 %s14, 1
        // Predicated region
        $region13: #{tpu_custom_call.1} parent=11 // pred_check
          %p165 = pneg %p61
        $region14: #{tpu_custom_call.1} parent=11 // pred_check_branch
          %167 = sbr.rel (%p165) target = $region16
        $region15: #{tpu_custom_call.1} parent=11 // pred_region
          _
        $region16: #{tpu_custom_call.1} parent=11 // pred_fallthru
          _
        // Predicated region
        $region17: #{tpu_custom_call.1} parent=11 // pred_check
          %p168 = pneg %p82
        $region18: #{tpu_custom_call.1} parent=11 // pred_check_branch
          %170 = sbr.rel (%p168) target = $region20
        $region19: #{tpu_custom_call.1} parent=11 // pred_region
          _
        $region20: #{tpu_custom_call.1} parent=11 // pred_fallthru
          _
        // Predicated region
        $region21: #{tpu_custom_call.1} parent=11 // pred_check
          %p171 = pneg %p103
        $region22: #{tpu_custom_call.1} parent=11 // pred_check_branch
          %173 = sbr.rel (%p171) target = $region24
        $region23: #{tpu_custom_call.1} parent=11 // pred_region
          _
        $region24: #{tpu_custom_call.1} parent=11 // pred_fallthru
          _
        // Predicated region
        $region25: #{tpu_custom_call.1} parent=11 // pred_check
          %p174 = pneg %p124
        $region26: #{tpu_custom_call.1} parent=11 // pred_check_branch
          %176 = sbr.rel (%p174) target = $region28
        $region27: #{tpu_custom_call.1} parent=11 // pred_region
          _
        $region28: #{tpu_custom_call.1} parent=11 // pred_fallthru
          _
      $region12: #{tpu_custom_call.1} parent=5 // pred_fallthru
        _
      %p177 = scmp.lt.s32.totalorder %s14, 2
      // Predicated region
      $region29: #{tpu_custom_call.1} parent=5 // pred_check
        %p178 = pneg %p177
      $region30: #{tpu_custom_call.1} parent=5 // pred_check_branch
        %180 = sbr.rel (%p178) target = $region32
      $region31: #{tpu_custom_call.1} parent=5 // pred_region
        // Predicated region
        $region33: #{tpu_custom_call.1} parent=31 // pred_check
          %p181 = pneg %p34
        $region34: #{tpu_custom_call.1} parent=31 // pred_check_branch
          %183 = sbr.rel (%p181) target = $region36
        $region35: #{tpu_custom_call.1} parent=31 // pred_region
          %p184 = scmp.lt.s32.totalorder %s14, 1
          %s185 = scalar_select %p184, %s14, 1
          %s186 = smul.addr %s185, 2
          %s187 = smul.addr %s186, 2
          %s188 = scalar_lea.vmem %s0, %s187
        $region36: #{tpu_custom_call.1} parent=31 // pred_fallthru
          _
      $region32: #{tpu_custom_call.1} parent=5 // pred_fallthru
        _
      %p189 = scmp.le.s32.totalorder 1, %s14
      %p190 = scmp.lt.s32.totalorder %s14, 3
      %p191 = pnand %p189, %p190
      %p192 = pneg %p191
      // Predicated region
      $region37: #{tpu_custom_call.1} parent=5 // pred_check
        _
      $region38: #{tpu_custom_call.1} parent=5 // pred_check_branch
        %194 = sbr.rel (%p191) target = $region40
      $region39: #{tpu_custom_call.1} parent=5 // pred_region
        %s195 = ssub.s32 %s14, 1
        %p196 = scmp.lt.s32.totalorder %s19, 1
        %s197 = scalar_select %p196, %s19, 1
        %s198 = smul.addr %s197, 2
        %s199 = smul.addr %s198, 2
        %s200 = scalar_lea.vmem %s0, %s199
        %p201 = pneg %p40
        %p202 = pneg %p37
        %p203 = pneg %p61
        %p204 = pneg %p58
        %p205 = pneg %p82
        %p206 = pneg %p79
        %p207 = pneg %p103
        %p208 = pneg %p100
        %p209 = pneg %p124
        %p210 = pneg %p121
        %p211 = pneg %p150
        %p212 = pneg %p147
        %s213 = sand.u32 %s137, 1
        %s214 = scalar_lea.sflag [#allocation4], %s213
        %s215 = sand.u32 %s137, 1
        %s216 = smul.addr %s215, 64
        %s217 = scalar_lea.vmem [#allocation3], %s216
        %p218 = scmp.lt.s32.totalorder %s19, 1
        %s219 = scalar_select %p218, %s19, 1
        %s220 = smul.addr %s219, 2
        %s221 = smul.addr %s220, 2
        %s222 = scalar_lea.vmem %s0, %s221
        %v224 = vld [vmem:[%s4] sm:$0xff]
        %v225 = vld [vmem:[%s4 + $0x8] sm:$0xff]
        %v226 = vld [vmem:[%s4 + $0x10] sm:$0xff]
        %v227 = vld [vmem:[%s4 + $0x18] sm:$0xff]
        %v228 = vld [vmem:[%s4 + $0x20] sm:$0xff]
        %v229 = vlaneseq
        %v230 = vshrl.u32 %v229, 7
        %v231 = vlaneseq
        %v232 = vand.u32 %v231, 127
        %v233 = vmul.u32 %v230, 4
        %vm234 = vcmp.ge.s32.totalorder %v232, %v233
        %v235 = vadd.s32 %v233, 4
        %vm236 = vcmp.lt.s32.totalorder %v232, %v235
        %vm237 = vmand %vm234, %vm236
        %v238 = vsel %vm237, 1, 0
        %v239 = vcvt.s32.f32 %v238
        %v240 = vmul.u32 %v232, 4
        %vm241 = vcmp.ge.s32.totalorder %v230, %v240
        %v242 = vadd.s32 %v240, 4
        %vm243 = vcmp.lt.s32.totalorder %v230, %v242
        %vm244 = vmand %vm241, %vm243
        %v245 = vsel %vm244, 1, 0
        %v246 = vcvt.s32.f32 %v245
        %v247 = vadd.s32 %v230, 8
        %vm248 = vcmp.ge.s32.totalorder %v247, %v240
        %vm249 = vcmp.lt.s32.totalorder %v247, %v242
        %vm250 = vmand %vm248, %vm249
        %v251 = vsel %vm250, 1, 0
        %v252 = vcvt.s32.f32 %v251
        %v253 = vadd.s32 %v232, 128
        %v254 = vand.u32 %v232, 15
        %v255 = vand.u32 %v253, 15
        %vm256 = vcmp.ge.s32.totalorder %v232, 16
        %vm257 = vcmp.ge.s32.totalorder %v253, 16
        %vm258 = vcmp.lt.s32.totalorder %v232, 240
        %vm259 = vcmp.lt.s32.totalorder %v253, 240
        %vm260 = vcmp.ge.s32.totalorder %v254, 1
        %vm261 = vcmp.ge.s32.totalorder %v255, 1
        %vm262 = vcmp.le.s32.totalorder %v254, 14
        %vm263 = vcmp.le.s32.totalorder %v255, 14
        %vm264 = vmand %vm256, %vm260
        %vm265 = vmand %vm257, %vm261
        %vm266 = vmand %vm256, %vm262
        %vm267 = vmand %vm257, %vm263
        %vm268 = vmand %vm258, %vm260
        %vm269 = vmand %vm259, %vm261
        %vm270 = vmand %vm258, %vm262
        %vm271 = vmand %vm259, %vm263
        %v272 = vld [vmem:[%s222] sm:$0xf]
        %v273 = vld [vmem:[%s1] sm:$0xf]
        %275 = vst [vmem:[#allocation1] ss:$4 sm:$0xff] %v272
        %v276 = vld.sshfl [vmem:[#allocation1] sm:$0xff pattern:$0x73625140]
        %v277 = vld.sshfl [vmem:[#allocation1 + $0x8] sm:$0xff pattern:$0x73625140]
        %vm278 = vcmask 31744
        %v280 = vsel %vm278, %v273, 0
        %vm282 = vcmask 1041408
        %v283 = vsel %vm282, %v276, 0
        %v285 = vsel %vm282, %v277, 0
        %287 = vmatpush.bf16.msra.mxu0 0
        %288 = vmatpush.bf16.msra.mxu0 0
        %289 = vmatpush.bf16.msra.mxu0 0
        %290 = vmatpush.bf16.msra.mxu0 0
        %291 = vmatpush.bf16.msra.mxu0 0
        %292 = vmatpush.bf16.msra.mxu0 0
        %293 = vmatpush.bf16.msra.mxu0 0
        %294 = vmatpush.bf16.msra.mxu0 %v283
        %295 = vmatmul.bf16.gmra.mxu0 %v280
        %v296 = vpop.f32.mrf.mxu0
        %v297 = vadd.f32 0.0, %v296
        %v298 = vpop.f32.mrf.mxu0
        %299 = vdwg.mxu0
        %300 = vmatpush.bf16.msra.mxu0 0
        %301 = vmatpush.bf16.msra.mxu0 0
        %302 = vmatpush.bf16.msra.mxu0 0
        %303 = vmatpush.bf16.msra.mxu0 0
        %304 = vmatpush.bf16.msra.mxu0 0
        %305 = vmatpush.bf16.msra.mxu0 0
        %306 = vmatpush.bf16.msra.mxu0 0
        %307 = vmatpush.bf16.msra.mxu0 %v285
        %308 = vmatmul.bf16.gmra.mxu0 %v280
        %v309 = vpop.f32.mrf.mxu0
        %v310 = vadd.f32 0.0, %v309
        %v311 = vpop.f32.mrf.mxu0
        %312 = vdwg.mxu0
        %v313 = vadd.f32 %v297, %v310
        %314 = vadd.xlane.f32.xlu0 %v313
        %v315 = vpop.xlane.xlu0 %314
        %v316 = vmul.f32 %v297, %v297
        %v317 = vmul.f32 %v310, %v310
        %v318 = vadd.f32 %v316, %v317
        %319 = vadd.xlane.f32.xlu0 %v318
        %v320 = vpop.xlane.xlu0 %319
        %vm321 = vcmask 7168
        %v322 = vsel %vm321, %v315, %v320
        %vm323 = vcmask 64512
        %v325 = vsel %vm323, %v239, 0
        %327 = vmatpush.msra.mxu0 0.0
        %328 = vmatpush.msra.mxu0 0.0
        %329 = vmatpush.msra.mxu0 0.0
        %330 = vmatpush.msra.mxu0 0.0
        %331 = vmatpush.msra.mxu0 0.0
        %332 = vmatpush.msra.mxu0 0.0
        %333 = vmatpush.msra.mxu0 0.0
        %334 = vmatpush.msra.mxu0 0.0
        %335 = vmatpush.msra.mxu0 0.0
        %336 = vmatpush.msra.mxu0 0.0
        %337 = vmatpush.msra.mxu0 0.0
        %338 = vmatpush.msra.mxu0 0.0
        %339 = vmatpush.msra.mxu0 0.0
        %340 = vmatpush.msra.mxu0 0.0
        %341 = vmatpush.msra.mxu0 0.0
        %342 = vmatpush.msra.mxu0 %v322
        %343 = vmatmul.f32.gmra.mxu0 %v325
        %v344 = vpop.f32.mrf.mxu0
        %v345 = vadd.f32 0.0, %v344
        %346 = vdwg.mxu0
        %v347 = vmul.f32 %v345, 0.0009765625
        %v348 = vmul.f32 %v347, %v347
        %350 = vrot.lane.b32.xlu0 %v348, 1
        %v351 = vpop.permute.xlu0 %350
        %v353 = vsub.f32 %v347, %v351
        %v354 = vmax.f32 %v353, 0.0
        %v355 = vadd.f32 %v354, 1e-05
        %v356 = vrsqrt.pop %v355
        %v357 = vmul.f32 %v356, %v355
        %v358 = vmul.f32 %v357, %v356
        %v359 = vmul.f32 0.5, %v358
        %v360 = vsub.f32 1.5, %v359
        %v361 = vmul.f32 %v356, %v360
        %vm362 = vweird.f32 %v355
        %vm363 = vweird.f32 %v356
        %vm364 = vmor %vm362, %vm363
        %v365 = vsel %vm364, %v356, %v361
        %v366 = vsel %vm321, %v347, %v365
        %vm367 = vcmask 15360
        %v369 = vsel %vm367, %v246, 0
        %v372 = vsel %vm282, %v366, 0
        %374 = vmatpush.msra.mxu0 0.0
        %375 = vmatpush.msra.mxu0 0.0
        %376 = vmatpush.msra.mxu0 0.0
        %377 = vmatpush.msra.mxu0 0.0
        %378 = vmatpush.msra.mxu0 0.0
        %379 = vmatpush.msra.mxu0 0.0
        %380 = vmatpush.msra.mxu0 0.0
        %381 = vmatpush.msra.mxu0 0.0
        %382 = vmatpush.msra.mxu0 0.0
        %383 = vmatpush.msra.mxu0 0.0
        %384 = vmatpush.msra.mxu0 0.0
        %385 = vmatpush.msra.mxu0 0.0
        %386 = vmatpush.msra.mxu0 0.0
        %387 = vmatpush.msra.mxu0 0.0
        %388 = vmatpush.msra.mxu0 0.0
        %389 = vmatpush.msra.mxu0 %v372
        %390 = vmatmul.f32.gmra.mxu0 %v369
        %v391 = vpop.f32.mrf.mxu0
        %v392 = vadd.f32 0.0, %v391
        %393 = vdwg.mxu0
        %395 = vrot.lane.b32.xlu0 %v224, 1
        %v396 = vpop.permute.xlu0 %395
        %v398 = vmul.f32 %v392, %v396
        %400 = vrot.lane.b32.xlu0 %v398, 127
        %v401 = vpop.permute.xlu0 %400
        %v403 = vmul.f32 %v392, %v401
        %405 = vrot.lane.b32.xlu0 %v403, 1
        %v406 = vpop.permute.xlu0 %405
        %v408 = vsub.f32 %v224, %v406
        %409 = vset.pattern.permute.xlu0 1
        %410 = vperm.xlu0 %409, %v398
        %v411 = vpop.permute.xlu0 %410
        %v413 = vmul.f32 %v297, %v411
        %v414 = vmul.f32 %v310, %v411
        %416 = vset.pattern.permute.xlu0 1
        %417 = vperm.xlu0 %416, %v408
        %v418 = vpop.permute.xlu0 %417
        %v420 = vadd.f32 %v413, %v418
        %v421 = vadd.f32 %v414, %v418
        %v422 = vmul.f32 %v420, 0.5
        %v423 = vmul.f32 %v421, 0.5
        %v424 = vmul.f32 %v420, 0.70710677
        %v425 = vmul.f32 %v421, 0.70710677
        %v426 = vmul.f32 %v424, %v424
        %v427 = vmin.f32 16.0, %v426
        %v428 = vmul.f32 %v427, 2.1237322e-06
        %v429 = vadd.f32 %v428, 0.00028619796
        %v430 = vmul.f32 %v427, %v429
        %v431 = vadd.f32 %v430, 0.0036580483
        %v432 = vmul.f32 %v427, %v431
        %v433 = vadd.f32 %v432, 0.05243302
        %v434 = vmul.f32 %v427, %v433
        %v435 = vadd.f32 %v434, 0.18741608
        %v436 = vmul.f32 %v427, %v435
        %v437 = vadd.f32 %v436, 1.1283791
        %v438 = vmul.f32 %v424, %v437
        %v439 = vmul.f32 %v427, 3.8918573e-05
        %v440 = vadd.f32 %v439, 0.001143296
        %v441 = vmul.f32 %v427, %v440
        %v442 = vadd.f32 %v441, 0.014752088
        %v443 = vmul.f32 %v427, %v442
        %v444 = vadd.f32 %v443, 0.112945676
        %v445 = vmul.f32 %v427, %v444
        %v446 = vadd.f32 %v445, 0.4994258
        %v447 = vmul.f32 %v427, %v446
        %v448 = vadd.f32 %v447, 1.0
        %v449 = vrcp.pop %v448
        %v450 = vmul.f32 %v448, %v449
        %v451 = vsub.f32 1.0, %v450
        %v452 = vmul.f32 %v449, %v451
        %v453 = vadd.f32 %v449, %v452
        %vm454 = vweird.f32 %v448
        %vm455 = vweird.f32 %v449
        %vm456 = vmor %vm454, %vm455
        %v457 = vsel %vm456, %v449, %v453
        %v458 = vand.u32 2147483647, %v448
        %vm459 = vcmp.eq.f32.partialorder %v458, 8.507059e+37
        %v460 = vand.u32 %v448, 2147483648
        %v461 = vor.u32 1.1754944e-38, %v460
        %v462 = vsel %vm459, %v461, %v457
        %v463 = vmul.f32 %v438, %v462
        %v464 = vmin.f32 %v463, 1.0
        %v465 = vmax.f32 %v464, -1.0
        %v466 = vmul.f32 %v425, %v425
        %v467 = vmin.f32 16.0, %v466
        %v468 = vmul.f32 %v467, 2.1237322e-06
        %v469 = vadd.f32 %v468, 0.00028619796
        %v470 = vmul.f32 %v467, %v469
        %v471 = vadd.f32 %v470, 0.0036580483
        %v472 = vmul.f32 %v467, %v471
        %v473 = vadd.f32 %v472, 0.05243302
        %v474 = vmul.f32 %v467, %v473
        %v475 = vadd.f32 %v474, 0.18741608
        %v476 = vmul.f32 %v467, %v475
        %v477 = vadd.f32 %v476, 1.1283791
        %v478 = vmul.f32 %v425, %v477
        %v479 = vmul.f32 %v467, 3.8918573e-05
        %v480 = vadd.f32 %v479, 0.001143296
        %v481 = vmul.f32 %v467, %v480
        %v482 = vadd.f32 %v481, 0.014752088
        %v483 = vmul.f32 %v467, %v482
        %v484 = vadd.f32 %v483, 0.112945676
        %v485 = vmul.f32 %v467, %v484
        %v486 = vadd.f32 %v485, 0.4994258
        %v487 = vmul.f32 %v467, %v486
        %v488 = vadd.f32 %v487, 1.0
        %v489 = vrcp.pop %v488
        %v490 = vmul.f32 %v488, %v489
        %v491 = vsub.f32 1.0, %v490
        %v492 = vmul.f32 %v489, %v491
        %v493 = vadd.f32 %v489, %v492
        %vm494 = vweird.f32 %v488
        %vm495 = vweird.f32 %v489
        %vm496 = vmor %vm494, %vm495
        %v497 = vsel %vm496, %v489, %v493
        %v498 = vand.u32 2147483647, %v488
        %vm499 = vcmp.eq.f32.partialorder %v498, 8.507059e+37
        %v500 = vand.u32 %v488, 2147483648
        %v501 = vor.u32 1.1754944e-38, %v500
        %v502 = vsel %vm499, %v501, %v497
        %v503 = vmul.f32 %v478, %v502
        %v504 = vmin.f32 %v503, 1.0
        %v505 = vmax.f32 %v504, -1.0
        %v506 = vadd.f32 %v465, 1.0
        %v507 = vadd.f32 %v505, 1.0
        %v508 = vmul.f32 %v422, %v506
        %v509 = vmul.f32 %v423, %v507
        %v510 = vpack.c.bf16 %v508, %v508
        %v511 = vpack.c.bf16 %v509, %v509
        %v512 = vld [vmem:[%s2] sm:$0xf]
        %v513 = vld [vmem:[%s2 + $0x4] sm:$0xf]
        %v516 = vunpack.c.l.b16 %v512
        %v517 = vunpack.c.l.b16 %v513
        %v518 = vpack.c.b16 %v517, %v516
        %v520 = vsel %vm323, %v518, 0
        %vm522 = vcmask 1043456
        %v524 = vsel %vm522, %v510, 0
        %v527 = vsel %vm522, %v511, 0
        %529 = vmatpush.bf16.msra.mxu0 0
        %530 = vmatpush.bf16.msra.mxu0 0
        %531 = vmatpush.bf16.msra.mxu0 0
        %532 = vmatpush.bf16.msra.mxu0 0
        %533 = vmatpush.bf16.msra.mxu0 0
        %534 = vmatpush.bf16.msra.mxu0 0
        %535 = vmatpush.bf16.msra.mxu0 0
        %536 = vmatpush.bf16.msra.mxu0 %v524
        %537 = vmatmul.bf16.gmra.mxu0 %v520
        %v538 = vpop.f32.mrf.mxu0
        %v539 = vadd.f32 0.0, %v538
        %v540 = vpop.f32.mrf.mxu0
        %v541 = vadd.f32 0.0, %v540
        %542 = vdwg.mxu0
        %543 = vmatpush.bf16.msra.mxu0 0
        %544 = vmatpush.bf16.msra.mxu0 0
        %545 = vmatpush.bf16.msra.mxu0 0
        %546 = vmatpush.bf16.msra.mxu0 0
        %547 = vmatpush.bf16.msra.mxu0 0
        %548 = vmatpush.bf16.msra.mxu0 0
        %549 = vmatpush.bf16.msra.mxu0 0
        %550 = vmatpush.bf16.msra.mxu0 %v527
        %551 = vmatmul.bf16.gmra.mxu0 %v520
        %v552 = vpop.f32.mrf.mxu0
        %v553 = vadd.f32 0.0, %v552
        %v554 = vpop.f32.mrf.mxu0
        %v555 = vadd.f32 0.0, %v554
        %556 = vdwg.mxu0
        %v557 = vadd.f32 %v539, %v553
        %558 = vadd.xlane.f32.xlu0 %v557
        %v559 = vpop.xlane.xlu0 %558
        %v560 = vadd.f32 %v541, %v555
        %561 = vadd.xlane.f32.xlu0 %v560
        %v562 = vpop.xlane.xlu0 %561
        %v563 = vmul.f32 %v539, %v539
        %v564 = vmul.f32 %v553, %v553
        %v565 = vmul.f32 %v541, %v541
        %v566 = vmul.f32 %v555, %v555
        %v567 = vadd.f32 %v563, %v564
        %568 = vadd.xlane.f32.xlu0 %v567
        %v569 = vpop.xlane.xlu0 %568
        %v570 = vadd.f32 %v565, %v566
        %571 = vadd.xlane.f32.xlu0 %v570
        %v572 = vpop.xlane.xlu0 %571
        %v573 = vsel %vm321, %v559, %v569
        %v574 = vsel %vm321, %v562, %v572
        %vm575 = vcmask 130048
        %v576 = vsel %vm575, %v239, 0
        %578 = vmatpush.msra.mxu0 0.0
        %579 = vmatpush.msra.mxu0 0.0
        %580 = vmatpush.msra.mxu0 0.0
        %581 = vmatpush.msra.mxu0 0.0
        %582 = vmatpush.msra.mxu0 0.0
        %583 = vmatpush.msra.mxu0 0.0
        %584 = vmatpush.msra.mxu0 0.0
        %585 = vmatpush.msra.mxu0 0.0
        %586 = vmatpush.msra.mxu0 0.0
        %587 = vmatpush.msra.mxu0 0.0
        %588 = vmatpush.msra.mxu0 0.0
        %589 = vmatpush.msra.mxu0 0.0
        %590 = vmatpush.msra.mxu0 0.0
        %591 = vmatpush.msra.mxu0 0.0
        %592 = vmatpush.msra.mxu0 %v574
        %593 = vmatpush.msra.mxu0 %v573
        %594 = vmatmul.f32.gmra.mxu0 %v576
        %v595 = vpop.f32.mrf.mxu0
        %v596 = vadd.f32 0.0, %v595
        %597 = vdwg.mxu0
        %v598 = vmul.f32 %v596, 0.0009765625
        %v599 = vmul.f32 %v598, %v598
        %601 = vrot.lane.b32.xlu0 %v599, 1
        %v602 = vpop.permute.xlu0 %601
        %v604 = vsub.f32 %v598, %v602
        %v605 = vmax.f32 %v604, 0.0
        %v606 = vadd.f32 %v605, 1e-05
        %v607 = vrsqrt.pop %v606
        %v608 = vmul.f32 %v607, %v606
        %v609 = vmul.f32 %v608, %v607
        %v610 = vmul.f32 0.5, %v609
        %v611 = vsub.f32 1.5, %v610
        %v612 = vmul.f32 %v607, %v611
        %vm613 = vweird.f32 %v606
        %vm614 = vweird.f32 %v607
        %vm615 = vmor %vm613, %vm614
        %v616 = vsel %vm615, %v607, %v612
        %v617 = vsel %vm321, %v598, %v616
        %v618 = vsel %vm278, %v246, 0
        %v621 = vsel %vm278, %v252, 0
        %v624 = vsel %vm522, %v617, 0
        %626 = vmatpush.msra.mxu0 0.0
        %627 = vmatpush.msra.mxu0 0.0
        %628 = vmatpush.msra.mxu0 0.0
        %629 = vmatpush.msra.mxu0 0.0
        %630 = vmatpush.msra.mxu0 0.0
        %631 = vmatpush.msra.mxu0 0.0
        %632 = vmatpush.msra.mxu0 0.0
        %633 = vmatpush.msra.mxu0 0.0
        %634 = vmatpush.msra.mxu0 0.0
        %635 = vmatpush.msra.mxu0 0.0
        %636 = vmatpush.msra.mxu0 0.0
        %637 = vmatpush.msra.mxu0 0.0
        %638 = vmatpush.msra.mxu0 0.0
        %639 = vmatpush.msra.mxu0 0.0
        %640 = vmatpush.msra.mxu0 0.0
        %641 = vmatpush.msra.mxu0 %v624
        %642 = vmatmul.f32.gmra.mxu0 %v618
        %v643 = vpop.f32.mrf.mxu0
        %v644 = vadd.f32 0.0, %v643
        %645 = vmatmul.f32.gmra.mxu0 %v621
        %v646 = vpop.f32.mrf.mxu0
        %v647 = vadd.f32 0.0, %v646
        %648 = vdwg.mxu0
        %651 = vrot.lane.b32.xlu0 %v225, 1
        %v652 = vpop.permute.xlu0 %651
        %653 = vrot.lane.b32.xlu0 %v226, 1
        %v654 = vpop.permute.xlu0 %653
        %v657 = vmul.f32 %v644, %v652
        %v658 = vmul.f32 %v647, %v654
        %661 = vrot.lane.b32.xlu0 %v657, 127
        %v662 = vpop.permute.xlu0 %661
        %663 = vrot.lane.b32.xlu0 %v658, 127
        %v664 = vpop.permute.xlu0 %663
        %v667 = vmul.f32 %v644, %v662
        %v668 = vmul.f32 %v647, %v664
        %671 = vrot.lane.b32.xlu0 %v667, 1
        %v672 = vpop.permute.xlu0 %671
        %673 = vrot.lane.b32.xlu0 %v668, 1
        %v674 = vpop.permute.xlu0 %673
        %v677 = vsub.f32 %v225, %v672
        %v678 = vsub.f32 %v226, %v674
        %679 = vset.pattern.permute.xlu0 1
        %680 = vperm.xlu0 %679, %v657
        %v681 = vpop.permute.xlu0 %680
        %683 = vset.pattern.permute.xlu0 1
        %684 = vperm.xlu0 %683, %v658
        %v685 = vpop.permute.xlu0 %684
        %v687 = vmul.f32 %v539, %v681
        %v688 = vmul.f32 %v553, %v681
        %v689 = vmul.f32 %v541, %v685
        %v690 = vmul.f32 %v555, %v685
        %692 = vset.pattern.permute.xlu0 1
        %693 = vperm.xlu0 %692, %v677
        %v694 = vpop.permute.xlu0 %693
        %697 = vset.pattern.permute.xlu0 1
        %698 = vperm.xlu0 %697, %v678
        %v699 = vpop.permute.xlu0 %698
        %v701 = vadd.f32 %v687, %v694
        %v702 = vadd.f32 %v688, %v694
        %v703 = vadd.f32 %v689, %v699
        %v704 = vadd.f32 %v690, %v699
        %v705 = vmul.f32 %v701, 0.5
        %v706 = vmul.f32 %v702, 0.5
        %v707 = vmul.f32 %v703, 0.5
        %v708 = vmul.f32 %v704, 0.5
        %v709 = vmul.f32 %v701, 0.70710677
        %v710 = vmul.f32 %v702, 0.70710677
        %v711 = vmul.f32 %v703, 0.70710677
        %v712 = vmul.f32 %v704, 0.70710677
        %v713 = vmul.f32 %v709, %v709
        %v714 = vmin.f32 16.0, %v713
        %v715 = vmul.f32 %v714, 2.1237322e-06
        %v716 = vadd.f32 %v715, 0.00028619796
        %v717 = vmul.f32 %v714, %v716
        %v718 = vadd.f32 %v717, 0.0036580483
        %v719 = vmul.f32 %v714, %v718
        %v720 = vadd.f32 %v719, 0.05243302
        %v721 = vmul.f32 %v714, %v720
        %v722 = vadd.f32 %v721, 0.18741608
        %v723 = vmul.f32 %v714, %v722
        %v724 = vadd.f32 %v723, 1.1283791
        %v725 = vmul.f32 %v709, %v724
        %v726 = vmul.f32 %v714, 3.8918573e-05
        %v727 = vadd.f32 %v726, 0.001143296
        %v728 = vmul.f32 %v714, %v727
        %v729 = vadd.f32 %v728, 0.014752088
        %v730 = vmul.f32 %v714, %v729
        %v731 = vadd.f32 %v730, 0.112945676
        %v732 = vmul.f32 %v714, %v731
        %v733 = vadd.f32 %v732, 0.4994258
        %v734 = vmul.f32 %v714, %v733
        %v735 = vadd.f32 %v734, 1.0
        %v736 = vrcp.pop %v735
        %v737 = vmul.f32 %v735, %v736
        %v738 = vsub.f32 1.0, %v737
        %v739 = vmul.f32 %v736, %v738
        %v740 = vadd.f32 %v736, %v739
        %vm741 = vweird.f32 %v735
        %vm742 = vweird.f32 %v736
        %vm743 = vmor %vm741, %vm742
        %v744 = vsel %vm743, %v736, %v740
        %v745 = vand.u32 2147483647, %v735
        %vm746 = vcmp.eq.f32.partialorder %v745, 8.507059e+37
        %v747 = vand.u32 %v735, 2147483648
        %v748 = vor.u32 1.1754944e-38, %v747
        %v749 = vsel %vm746, %v748, %v744
        %v750 = vmul.f32 %v725, %v749
        %v751 = vmin.f32 %v750, 1.0
        %v752 = vmax.f32 %v751, -1.0
        %v753 = vmul.f32 %v710, %v710
        %v754 = vmin.f32 16.0, %v753
        %v755 = vmul.f32 %v754, 2.1237322e-06
        %v756 = vadd.f32 %v755, 0.00028619796
        %v757 = vmul.f32 %v754, %v756
        %v758 = vadd.f32 %v757, 0.0036580483
        %v759 = vmul.f32 %v754, %v758
        %v760 = vadd.f32 %v759, 0.05243302
        %v761 = vmul.f32 %v754, %v760
        %v762 = vadd.f32 %v761, 0.18741608
        %v763 = vmul.f32 %v754, %v762
        %v764 = vadd.f32 %v763, 1.1283791
        %v765 = vmul.f32 %v710, %v764
        %v766 = vmul.f32 %v754, 3.8918573e-05
        %v767 = vadd.f32 %v766, 0.001143296
        %v768 = vmul.f32 %v754, %v767
        %v769 = vadd.f32 %v768, 0.014752088
        %v770 = vmul.f32 %v754, %v769
        %v771 = vadd.f32 %v770, 0.112945676
        %v772 = vmul.f32 %v754, %v771
        %v773 = vadd.f32 %v772, 0.4994258
        %v774 = vmul.f32 %v754, %v773
        %v775 = vadd.f32 %v774, 1.0
        %v776 = vrcp.pop %v775
        %v777 = vmul.f32 %v775, %v776
        %v778 = vsub.f32 1.0, %v777
        %v779 = vmul.f32 %v776, %v778
        %v780 = vadd.f32 %v776, %v779
        %vm781 = vweird.f32 %v775
        %vm782 = vweird.f32 %v776
        %vm783 = vmor %vm781, %vm782
        %v784 = vsel %vm783, %v776, %v780
        %v785 = vand.u32 2147483647, %v775
        %vm786 = vcmp.eq.f32.partialorder %v785, 8.507059e+37
        %v787 = vand.u32 %v775, 2147483648
        %v788 = vor.u32 1.1754944e-38, %v787
        %v789 = vsel %vm786, %v788, %v784
        %v790 = vmul.f32 %v765, %v789
        %v791 = vmin.f32 %v790, 1.0
        %v792 = vmax.f32 %v791, -1.0
        %v793 = vmul.f32 %v711, %v711
        %v794 = vmin.f32 16.0, %v793
        %v795 = vmul.f32 %v794, 2.1237322e-06
        %v796 = vadd.f32 %v795, 0.00028619796
        %v797 = vmul.f32 %v794, %v796
        %v798 = vadd.f32 %v797, 0.0036580483
        %v799 = vmul.f32 %v794, %v798
        %v800 = vadd.f32 %v799, 0.05243302
        %v801 = vmul.f32 %v794, %v800
        %v802 = vadd.f32 %v801, 0.18741608
        %v803 = vmul.f32 %v794, %v802
        %v804 = vadd.f32 %v803, 1.1283791
        %v805 = vmul.f32 %v711, %v804
        %v806 = vmul.f32 %v794, 3.8918573e-05
        %v807 = vadd.f32 %v806, 0.001143296
        %v808 = vmul.f32 %v794, %v807
        %v809 = vadd.f32 %v808, 0.014752088
        %v810 = vmul.f32 %v794, %v809
        %v811 = vadd.f32 %v810, 0.112945676
        %v812 = vmul.f32 %v794, %v811
        %v813 = vadd.f32 %v812, 0.4994258
        %v814 = vmul.f32 %v794, %v813
        %v815 = vadd.f32 %v814, 1.0
        %v816 = vrcp.pop %v815
        %v817 = vmul.f32 %v815, %v816
        %v818 = vsub.f32 1.0, %v817
        %v819 = vmul.f32 %v816, %v818
        %v820 = vadd.f32 %v816, %v819
        %vm821 = vweird.f32 %v815
        %vm822 = vweird.f32 %v816
        %vm823 = vmor %vm821, %vm822
        %v824 = vsel %vm823, %v816, %v820
        %v825 = vand.u32 2147483647, %v815
        %vm826 = vcmp.eq.f32.partialorder %v825, 8.507059e+37
        %v827 = vand.u32 %v815, 2147483648
        %v828 = vor.u32 1.1754944e-38, %v827
        %v829 = vsel %vm826, %v828, %v824
        %v830 = vmul.f32 %v805, %v829
        %v831 = vmin.f32 %v830, 1.0
        %v832 = vmax.f32 %v831, -1.0
        %v833 = vmul.f32 %v712, %v712
        %v834 = vmin.f32 16.0, %v833
        %v835 = vmul.f32 %v834, 2.1237322e-06
        %v836 = vadd.f32 %v835, 0.00028619796
        %v837 = vmul.f32 %v834, %v836
        %v838 = vadd.f32 %v837, 0.0036580483
        %v839 = vmul.f32 %v834, %v838
        %v840 = vadd.f32 %v839, 0.05243302
        %v841 = vmul.f32 %v834, %v840
        %v842 = vadd.f32 %v841, 0.18741608
        %v843 = vmul.f32 %v834, %v842
        %v844 = vadd.f32 %v843, 1.1283791
        %v845 = vmul.f32 %v712, %v844
        %v846 = vmul.f32 %v834, 3.8918573e-05
        %v847 = vadd.f32 %v846, 0.001143296
        %v848 = vmul.f32 %v834, %v847
        %v849 = vadd.f32 %v848, 0.014752088
        %v850 = vmul.f32 %v834, %v849
        %v851 = vadd.f32 %v850, 0.112945676
        %v852 = vmul.f32 %v834, %v851
        %v853 = vadd.f32 %v852, 0.4994258
        %v854 = vmul.f32 %v834, %v853
        %v855 = vadd.f32 %v854, 1.0
        %v856 = vrcp.pop %v855
        %v857 = vmul.f32 %v855, %v856
        %v858 = vsub.f32 1.0, %v857
        %v859 = vmul.f32 %v856, %v858
        %v860 = vadd.f32 %v856, %v859
        %vm861 = vweird.f32 %v855
        %vm862 = vweird.f32 %v856
        %vm863 = vmor %vm861, %vm862
        %v864 = vsel %vm863, %v856, %v860
        %v865 = vand.u32 2147483647, %v855
        %vm866 = vcmp.eq.f32.partialorder %v865, 8.507059e+37
        %v867 = vand.u32 %v855, 2147483648
        %v868 = vor.u32 1.1754944e-38, %v867
        %v869 = vsel %vm866, %v868, %v864
        %v870 = vmul.f32 %v845, %v869
        %v871 = vmin.f32 %v870, 1.0
        %v872 = vmax.f32 %v871, -1.0
        %v873 = vadd.f32 %v752, 1.0
        %v874 = vadd.f32 %v792, 1.0
        %v875 = vadd.f32 %v832, 1.0
        %v876 = vadd.f32 %v872, 1.0
        %v877 = vmul.f32 %v705, %v873
        %v878 = vmul.f32 %v706, %v874
        %v879 = vmul.f32 %v707, %v875
        %v880 = vmul.f32 %v708, %v876
        %881 = vst [vmem:[%s217] sm:$0xff] %v877
        %882 = vst [vmem:[%s217 + $0x8] sm:$0xff] %v878
        %883 = vst [vmem:[%s217 + $0x10] sm:$0xff] %v879
        %884 = vst [vmem:[%s217 + $0x18] sm:$0xff] %v880
        %885 = vrot.lane.b32.xlu0 %v508, 17
        %v886 = vpop.permute.xlu0 %885
        %887 = vrot.lane.b32.xlu0 %v509, 17
        %v888 = vpop.permute.xlu0 %887
        %vm889 = vcmp.lt.s32.totalorder %v232, 17
        %v890 = vsel %vm889, %v886, %v888
        %v891 = vsel %vm889, %v888, %v886
        %v892 = vsel %vm264, %v891, 0.0
        %v893 = vsel %vm265, %v890, 0.0
        %894 = vst [vmem:[#allocation2] sm:$0xff] %v892
        %895 = vst [vmem:[#allocation2 + $0x8] sm:$0xff] %v893
        %896 = vrot.lane.b32.xlu0 %v508, 16
        %v897 = vpop.permute.xlu0 %896
        %898 = vrot.lane.b32.xlu0 %v509, 16
        %v899 = vpop.permute.xlu0 %898
        %vm900 = vcmp.lt.s32.totalorder %v232, 16
        %v901 = vsel %vm900, %v897, %v899
        %v902 = vsel %vm900, %v899, %v897
        %v903 = vsel %vm256, %v902, 0.0
        %v904 = vsel %vm257, %v901, 0.0
        %905 = vst [vmem:[#allocation2 + $0x10] sm:$0xff] %v903
        %906 = vst [vmem:[#allocation2 + $0x18] sm:$0xff] %v904
        %907 = vrot.lane.b32.xlu0 %v508, 15
        %v908 = vpop.permute.xlu0 %907
        %909 = vrot.lane.b32.xlu0 %v509, 15
        %v910 = vpop.permute.xlu0 %909
        %vm911 = vcmp.lt.s32.totalorder %v232, 15
        %v912 = vsel %vm911, %v908, %v910
        %v913 = vsel %vm911, %v910, %v908
        %v914 = vsel %vm266, %v913, 0.0
        %v915 = vsel %vm267, %v912, 0.0
        %916 = vst [vmem:[#allocation2 + $0x20] sm:$0xff] %v914
        %917 = vst [vmem:[#allocation2 + $0x28] sm:$0xff] %v915
        %918 = vrot.lane.b32.xlu0 %v508, 1
        %v919 = vpop.permute.xlu0 %918
        %920 = vrot.lane.b32.xlu0 %v509, 1
        %v921 = vpop.permute.xlu0 %920
        %vm922 = vcmp.lt.s32.totalorder %v232, 1
        %v923 = vsel %vm922, %v919, %v921
        %v924 = vsel %vm922, %v921, %v919
        %v925 = vsel %vm260, %v924, 0.0
        %v926 = vsel %vm261, %v923, 0.0
        %927 = vst [vmem:[#allocation2 + $0x30] sm:$0xff] %v925
        %928 = vst [vmem:[#allocation2 + $0x38] sm:$0xff] %v926
        %929 = vst [vmem:[#allocation2 + $0x40] sm:$0xff] %v508
        %930 = vst [vmem:[#allocation2 + $0x48] sm:$0xff] %v509
        %931 = vrot.lane.b32.xlu0 %v508, 127
        %v932 = vpop.permute.xlu0 %931
        %933 = vrot.lane.b32.xlu0 %v509, 127
        %v934 = vpop.permute.xlu0 %933
        %vm935 = vcmp.lt.s32.totalorder %v232, 127
        %v936 = vsel %vm935, %v932, %v934
        %v937 = vsel %vm935, %v934, %v932
        %v938 = vsel %vm262, %v936, 0.0
        %v939 = vsel %vm263, %v937, 0.0
        %940 = vst [vmem:[#allocation2 + $0x50] sm:$0xff] %v938
        %941 = vst [vmem:[#allocation2 + $0x58] sm:$0xff] %v939
        %942 = vrot.lane.b32.xlu0 %v508, 113
        %v943 = vpop.permute.xlu0 %942
        %944 = vrot.lane.b32.xlu0 %v509, 113
        %v945 = vpop.permute.xlu0 %944
        %vm946 = vcmp.lt.s32.totalorder %v232, 113
        %v947 = vsel %vm946, %v943, %v945
        %v948 = vsel %vm946, %v945, %v943
        %v949 = vsel %vm268, %v947, 0.0
        %v950 = vsel %vm269, %v948, 0.0
        %951 = vst [vmem:[#allocation2 + $0x60] sm:$0xff] %v949
        %952 = vst [vmem:[#allocation2 + $0x68] sm:$0xff] %v950
        %953 = vrot.lane.b32.xlu0 %v508, 112
        %v954 = vpop.permute.xlu0 %953
        %955 = vrot.lane.b32.xlu0 %v509, 112
        %v956 = vpop.permute.xlu0 %955
        %vm957 = vcmp.lt.s32.totalorder %v232, 112
        %v958 = vsel %vm957, %v954, %v956
        %v959 = vsel %vm957, %v956, %v954
        %v960 = vsel %vm258, %v958, 0.0
        %v961 = vsel %vm259, %v959, 0.0
        %962 = vst [vmem:[#allocation2 + $0x70] sm:$0xff] %v960
        %963 = vst [vmem:[#allocation2 + $0x78] sm:$0xff] %v961
        %964 = vrot.lane.b32.xlu0 %v508, 111
        %v965 = vpop.permute.xlu0 %964
        %966 = vrot.lane.b32.xlu0 %v509, 111
        %v967 = vpop.permute.xlu0 %966
        %vm968 = vcmp.lt.s32.totalorder %v232, 111
        %v969 = vsel %vm968, %v965, %v967
        %v970 = vsel %vm968, %v967, %v965
        %v971 = vsel %vm270, %v969, 0.0
        %v972 = vsel %vm271, %v970, 0.0
        %973 = vst [vmem:[#allocation2 + $0x80] sm:$0xff] %v971
        %974 = vst [vmem:[#allocation2 + $0x88] sm:$0xff] %v972
        %v975 = vld [vmem:[%s3] sm:$0xf]
        %v976 = vld [vmem:[%s3 + $0x4] sm:$0xf]
        %v977 = vld [vmem:[#allocation2] sm:$0xff]
        %v978 = vld [vmem:[#allocation2 + $0x8] sm:$0xff]
        %v979 = vld [vmem:[#allocation2 + $0x10] sm:$0xff]
        %v980 = vld [vmem:[#allocation2 + $0x18] sm:$0xff]
        %v981 = vld [vmem:[#allocation2 + $0x20] sm:$0xff]
        %v982 = vld [vmem:[#allocation2 + $0x28] sm:$0xff]
        %v983 = vld [vmem:[#allocation2 + $0x30] sm:$0xff]
        %v984 = vld [vmem:[#allocation2 + $0x38] sm:$0xff]
        %v985 = vld [vmem:[#allocation2 + $0x40] sm:$0xff]
        %v986 = vld [vmem:[#allocation2 + $0x48] sm:$0xff]
        %v987 = vld [vmem:[#allocation2 + $0x50] sm:$0xff]
        %v988 = vld [vmem:[#allocation2 + $0x58] sm:$0xff]
        %v989 = vld [vmem:[#allocation2 + $0x60] sm:$0xff]
        %v990 = vld [vmem:[#allocation2 + $0x68] sm:$0xff]
        %v991 = vld [vmem:[#allocation2 + $0x70] sm:$0xff]
        %v992 = vld [vmem:[#allocation2 + $0x78] sm:$0xff]
        %v993 = vld [vmem:[#allocation2 + $0x80] sm:$0xff]
        %v994 = vld [vmem:[#allocation2 + $0x88] sm:$0xff]
        %v995 = vpack.c.bf16 %v979, %v977
        %v996 = vpack.c.bf16 %v980, %v978
        %v997 = vpack.c.bf16 %v983, %v981
        %v998 = vpack.c.bf16 %v984, %v982
        %v999 = vpack.c.bf16 %v987, %v985
        %v1000 = vpack.c.bf16 %v988, %v986
        %v1001 = vpack.c.bf16 %v991, %v989
        %v1002 = vpack.c.bf16 %v992, %v990
        %v1003 = vpack.c.bf16 %v993, %v993
        %v1004 = vpack.c.bf16 %v994, %v994
        %v1007 = vunpack.c.l.b16 %v975
        %v1008 = vunpack.c.l.b16 %v976
        %v1009 = vpack.c.b16 %v1008, %v1007
        %vm1010 = vcmask 588800
        %v1012 = vsel %vm1010, %v1009, 0
        %v1015 = vsel %vm522, %v1003, 0
        %v1018 = vsel %vm522, %v1004, 0
        %1020 = vmatpush.bf16.msra.mxu0 0
        %1021 = vmatpush.bf16.msra.mxu0 0
        %1022 = vmatpush.bf16.msra.mxu0 0
        %1023 = vmatpush.bf16.msra.mxu0 %v1015
        %1024 = vmatpush.bf16.msra.mxu0 %v1001
        %1025 = vmatpush.bf16.msra.mxu0 %v999
        %1026 = vmatpush.bf16.msra.mxu0 %v997
        %1027 = vmatpush.bf16.msra.mxu0 %v995
        %1028 = vmatmul.bf16.gmra.mxu0 %v1012
        %v1029 = vpop.f32.mrf.mxu0
        %v1030 = vadd.f32 0.0, %v1029
        %v1031 = vpop.f32.mrf.mxu0
        %v1032 = vadd.f32 0.0, %v1031
        %1033 = vdwg.mxu0
        %1034 = vmatpush.bf16.msra.mxu0 0
        %1035 = vmatpush.bf16.msra.mxu0 0
        %1036 = vmatpush.bf16.msra.mxu0 0
        %1037 = vmatpush.bf16.msra.mxu0 %v1018
        %1038 = vmatpush.bf16.msra.mxu0 %v1002
        %1039 = vmatpush.bf16.msra.mxu0 %v1000
        %1040 = vmatpush.bf16.msra.mxu0 %v998
        %1041 = vmatpush.bf16.msra.mxu0 %v996
        %1042 = vmatmul.bf16.gmra.mxu0 %v1012
        %v1043 = vpop.f32.mrf.mxu0
        %v1044 = vadd.f32 0.0, %v1043
        %v1045 = vpop.f32.mrf.mxu0
        %v1046 = vadd.f32 0.0, %v1045
        %1047 = vdwg.mxu0
        %v1048 = vadd.f32 %v1030, %v1044
        %1049 = vadd.xlane.f32.xlu0 %v1048
        %v1050 = vpop.xlane.xlu0 %1049
        %v1051 = vadd.f32 %v1032, %v1046
        %1052 = vadd.xlane.f32.xlu0 %v1051
        %v1053 = vpop.xlane.xlu0 %1052
        %v1054 = vmul.f32 %v1030, %v1030
        %v1055 = vmul.f32 %v1044, %v1044
        %v1056 = vmul.f32 %v1032, %v1032
        %v1057 = vmul.f32 %v1046, %v1046
        %v1058 = vadd.f32 %v1054, %v1055
        %1059 = vadd.xlane.f32.xlu0 %v1058
        %v1060 = vpop.xlane.xlu0 %1059
        %v1061 = vadd.f32 %v1056, %v1057
        %1062 = vadd.xlane.f32.xlu0 %v1061
        %v1063 = vpop.xlane.xlu0 %1062
        %v1064 = vsel %vm321, %v1050, %v1060
        %v1065 = vsel %vm321, %v1053, %v1063
        %1066 = vmatpush.msra.mxu0 0.0
        %1067 = vmatpush.msra.mxu0 0.0
        %1068 = vmatpush.msra.mxu0 0.0
        %1069 = vmatpush.msra.mxu0 0.0
        %1070 = vmatpush.msra.mxu0 0.0
        %1071 = vmatpush.msra.mxu0 0.0
        %1072 = vmatpush.msra.mxu0 0.0
        %1073 = vmatpush.msra.mxu0 0.0
        %1074 = vmatpush.msra.mxu0 0.0
        %1075 = vmatpush.msra.mxu0 0.0
        %1076 = vmatpush.msra.mxu0 0.0
        %1077 = vmatpush.msra.mxu0 0.0
        %1078 = vmatpush.msra.mxu0 0.0
        %1079 = vmatpush.msra.mxu0 0.0
        %1080 = vmatpush.msra.mxu0 %v1065
        %1081 = vmatpush.msra.mxu0 %v1064
        %1082 = vmatmul.f32.gmra.mxu0 %v576
        %v1083 = vpop.f32.mrf.mxu0
        %v1084 = vadd.f32 0.0, %v1083
        %1085 = vdwg.mxu0
        %v1086 = vmul.f32 %v1084, 0.0009765625
        %v1087 = vmul.f32 %v1086, %v1086
        %1089 = vrot.lane.b32.xlu0 %v1087, 1
        %v1090 = vpop.permute.xlu0 %1089
        %v1092 = vsub.f32 %v1086, %v1090
        %v1093 = vmax.f32 %v1092, 0.0
        %v1094 = vadd.f32 %v1093, 1e-05
        %v1095 = vrsqrt.pop %v1094
        %v1096 = vmul.f32 %v1095, %v1094
        %v1097 = vmul.f32 %v1096, %v1095
        %v1098 = vmul.f32 0.5, %v1097
        %v1099 = vsub.f32 1.5, %v1098
        %v1100 = vmul.f32 %v1095, %v1099
        %vm1101 = vweird.f32 %v1094
        %vm1102 = vweird.f32 %v1095
        %vm1103 = vmor %vm1101, %vm1102
        %v1104 = vsel %vm1103, %v1095, %v1100
        %v1105 = vsel %vm321, %v1086, %v1104
        %v1107 = vsel %vm522, %v1105, 0
        %1109 = vmatpush.msra.mxu0 0.0
        %1110 = vmatpush.msra.mxu0 0.0
        %1111 = vmatpush.msra.mxu0 0.0
        %1112 = vmatpush.msra.mxu0 0.0
        %1113 = vmatpush.msra.mxu0 0.0
        %1114 = vmatpush.msra.mxu0 0.0
        %1115 = vmatpush.msra.mxu0 0.0
        %1116 = vmatpush.msra.mxu0 0.0
        %1117 = vmatpush.msra.mxu0 0.0
        %1118 = vmatpush.msra.mxu0 0.0
        %1119 = vmatpush.msra.mxu0 0.0
        %1120 = vmatpush.msra.mxu0 0.0
        %1121 = vmatpush.msra.mxu0 0.0
        %1122 = vmatpush.msra.mxu0 0.0
        %1123 = vmatpush.msra.mxu0 0.0
        %1124 = vmatpush.msra.mxu0 %v1107
        %1125 = vmatmul.f32.gmra.mxu0 %v618
        %v1126 = vpop.f32.mrf.mxu0
        %v1127 = vadd.f32 0.0, %v1126
        %1128 = vmatmul.f32.gmra.mxu0 %v621
        %v1129 = vpop.f32.mrf.mxu0
        %v1130 = vadd.f32 0.0, %v1129
        %1131 = vdwg.mxu0
        %1134 = vrot.lane.b32.xlu0 %v227, 1
        %v1135 = vpop.permute.xlu0 %1134
        %1136 = vrot.lane.b32.xlu0 %v228, 1
        %v1137 = vpop.permute.xlu0 %1136
        %v1140 = vmul.f32 %v1127, %v1135
        %v1141 = vmul.f32 %v1130, %v1137
        %1144 = vrot.lane.b32.xlu0 %v1140, 127
        %v1145 = vpop.permute.xlu0 %1144
        %1146 = vrot.lane.b32.xlu0 %v1141, 127
        %v1147 = vpop.permute.xlu0 %1146
        %v1150 = vmul.f32 %v1127, %v1145
        %v1151 = vmul.f32 %v1130, %v1147
        %1154 = vrot.lane.b32.xlu0 %v1150, 1
        %v1155 = vpop.permute.xlu0 %1154
        %1156 = vrot.lane.b32.xlu0 %v1151, 1
        %v1157 = vpop.permute.xlu0 %1156
        %v1160 = vsub.f32 %v227, %v1155
        %v1161 = vsub.f32 %v228, %v1157
        %1162 = vset.pattern.permute.xlu0 1
        %1163 = vperm.xlu0 %1162, %v1140
        %v1164 = vpop.permute.xlu0 %1163
        %1166 = vset.pattern.permute.xlu0 1
        %1167 = vperm.xlu0 %1166, %v1141
        %v1168 = vpop.permute.xlu0 %1167
        %v1170 = vmul.f32 %v1030, %v1164
        %v1171 = vmul.f32 %v1044, %v1164
        %v1172 = vmul.f32 %v1032, %v1168
        %v1173 = vmul.f32 %v1046, %v1168
        %1175 = vset.pattern.permute.xlu0 1
        %1176 = vperm.xlu0 %1175, %v1160
        %v1177 = vpop.permute.xlu0 %1176
        %1180 = vset.pattern.permute.xlu0 1
        %1181 = vperm.xlu0 %1180, %v1161
        %v1182 = vpop.permute.xlu0 %1181
        %v1184 = vadd.f32 %v1170, %v1177
        %v1185 = vadd.f32 %v1171, %v1177
        %v1186 = vadd.f32 %v1172, %v1182
        %v1187 = vadd.f32 %v1173, %v1182
        %v1188 = vmul.f32 %v1184, 0.5
        %v1189 = vmul.f32 %v1185, 0.5
        %v1190 = vmul.f32 %v1186, 0.5
        %v1191 = vmul.f32 %v1187, 0.5
        %v1192 = vmul.f32 %v1184, 0.70710677
        %v1193 = vmul.f32 %v1185, 0.70710677
        %v1194 = vmul.f32 %v1186, 0.70710677
        %v1195 = vmul.f32 %v1187, 0.70710677
        %v1196 = vmul.f32 %v1192, %v1192
        %v1197 = vmin.f32 16.0, %v1196
        %v1198 = vmul.f32 %v1197, 2.1237322e-06
        %v1199 = vadd.f32 %v1198, 0.00028619796
        %v1200 = vmul.f32 %v1197, %v1199
        %v1201 = vadd.f32 %v1200, 0.0036580483
        %v1202 = vmul.f32 %v1197, %v1201
        %v1203 = vadd.f32 %v1202, 0.05243302
        %v1204 = vmul.f32 %v1197, %v1203
        %v1205 = vadd.f32 %v1204, 0.18741608
        %v1206 = vmul.f32 %v1197, %v1205
        %v1207 = vadd.f32 %v1206, 1.1283791
        %v1208 = vmul.f32 %v1192, %v1207
        %v1209 = vmul.f32 %v1197, 3.8918573e-05
        %v1210 = vadd.f32 %v1209, 0.001143296
        %v1211 = vmul.f32 %v1197, %v1210
        %v1212 = vadd.f32 %v1211, 0.014752088
        %v1213 = vmul.f32 %v1197, %v1212
        %v1214 = vadd.f32 %v1213, 0.112945676
        %v1215 = vmul.f32 %v1197, %v1214
        %v1216 = vadd.f32 %v1215, 0.4994258
        %v1217 = vmul.f32 %v1197, %v1216
        %v1218 = vadd.f32 %v1217, 1.0
        %v1219 = vrcp.pop %v1218
        %v1220 = vmul.f32 %v1218, %v1219
        %v1221 = vsub.f32 1.0, %v1220
        %v1222 = vmul.f32 %v1219, %v1221
        %v1223 = vadd.f32 %v1219, %v1222
        %vm1224 = vweird.f32 %v1218
        %vm1225 = vweird.f32 %v1219
        %vm1226 = vmor %vm1224, %vm1225
        %v1227 = vsel %vm1226, %v1219, %v1223
        %v1228 = vand.u32 2147483647, %v1218
        %vm1229 = vcmp.eq.f32.partialorder %v1228, 8.507059e+37
        %v1230 = vand.u32 %v1218, 2147483648
        %v1231 = vor.u32 1.1754944e-38, %v1230
        %v1232 = vsel %vm1229, %v1231, %v1227
        %v1233 = vmul.f32 %v1208, %v1232
        %v1234 = vmin.f32 %v1233, 1.0
        %v1235 = vmax.f32 %v1234, -1.0
        %v1236 = vmul.f32 %v1193, %v1193
        %v1237 = vmin.f32 16.0, %v1236
        %v1238 = vmul.f32 %v1237, 2.1237322e-06
        %v1239 = vadd.f32 %v1238, 0.00028619796
        %v1240 = vmul.f32 %v1237, %v1239
        %v1241 = vadd.f32 %v1240, 0.0036580483
        %v1242 = vmul.f32 %v1237, %v1241
        %v1243 = vadd.f32 %v1242, 0.05243302
        %v1244 = vmul.f32 %v1237, %v1243
        %v1245 = vadd.f32 %v1244, 0.18741608
        %v1246 = vmul.f32 %v1237, %v1245
        %v1247 = vadd.f32 %v1246, 1.1283791
        %v1248 = vmul.f32 %v1193, %v1247
        %v1249 = vmul.f32 %v1237, 3.8918573e-05
        %v1250 = vadd.f32 %v1249, 0.001143296
        %v1251 = vmul.f32 %v1237, %v1250
        %v1252 = vadd.f32 %v1251, 0.014752088
        %v1253 = vmul.f32 %v1237, %v1252
        %v1254 = vadd.f32 %v1253, 0.112945676
        %v1255 = vmul.f32 %v1237, %v1254
        %v1256 = vadd.f32 %v1255, 0.4994258
        %v1257 = vmul.f32 %v1237, %v1256
        %v1258 = vadd.f32 %v1257, 1.0
        %v1259 = vrcp.pop %v1258
        %v1260 = vmul.f32 %v1258, %v1259
        %v1261 = vsub.f32 1.0, %v1260
        %v1262 = vmul.f32 %v1259, %v1261
        %v1263 = vadd.f32 %v1259, %v1262
        %vm1264 = vweird.f32 %v1258
        %vm1265 = vweird.f32 %v1259
        %vm1266 = vmor %vm1264, %vm1265
        %v1267 = vsel %vm1266, %v1259, %v1263
        %v1268 = vand.u32 2147483647, %v1258
        %vm1269 = vcmp.eq.f32.partialorder %v1268, 8.507059e+37
        %v1270 = vand.u32 %v1258, 2147483648
        %v1271 = vor.u32 1.1754944e-38, %v1270
        %v1272 = vsel %vm1269, %v1271, %v1267
        %v1273 = vmul.f32 %v1248, %v1272
        %v1274 = vmin.f32 %v1273, 1.0
        %v1275 = vmax.f32 %v1274, -1.0
        %v1276 = vmul.f32 %v1194, %v1194
        %v1277 = vmin.f32 16.0, %v1276
        %v1278 = vmul.f32 %v1277, 2.1237322e-06
        %v1279 = vadd.f32 %v1278, 0.00028619796
        %v1280 = vmul.f32 %v1277, %v1279
        %v1281 = vadd.f32 %v1280, 0.0036580483
        %v1282 = vmul.f32 %v1277, %v1281
        %v1283 = vadd.f32 %v1282, 0.05243302
        %v1284 = vmul.f32 %v1277, %v1283
        %v1285 = vadd.f32 %v1284, 0.18741608
        %v1286 = vmul.f32 %v1277, %v1285
        %v1287 = vadd.f32 %v1286, 1.1283791
        %v1288 = vmul.f32 %v1194, %v1287
        %v1289 = vmul.f32 %v1277, 3.8918573e-05
        %v1290 = vadd.f32 %v1289, 0.001143296
        %v1291 = vmul.f32 %v1277, %v1290
        %v1292 = vadd.f32 %v1291, 0.014752088
        %v1293 = vmul.f32 %v1277, %v1292
        %v1294 = vadd.f32 %v1293, 0.112945676
        %v1295 = vmul.f32 %v1277, %v1294
        %v1296 = vadd.f32 %v1295, 0.4994258
        %v1297 = vmul.f32 %v1277, %v1296
        %v1298 = vadd.f32 %v1297, 1.0
        %v1299 = vrcp.pop %v1298
        %v1300 = vmul.f32 %v1298, %v1299
        %v1301 = vsub.f32 1.0, %v1300
        %v1302 = vmul.f32 %v1299, %v1301
        %v1303 = vadd.f32 %v1299, %v1302
        %vm1304 = vweird.f32 %v1298
        %vm1305 = vweird.f32 %v1299
        %vm1306 = vmor %vm1304, %vm1305
        %v1307 = vsel %vm1306, %v1299, %v1303
        %v1308 = vand.u32 2147483647, %v1298
        %vm1309 = vcmp.eq.f32.partialorder %v1308, 8.507059e+37
        %v1310 = vand.u32 %v1298, 2147483648
        %v1311 = vor.u32 1.1754944e-38, %v1310
        %v1312 = vsel %vm1309, %v1311, %v1307
        %v1313 = vmul.f32 %v1288, %v1312
        %v1314 = vmin.f32 %v1313, 1.0
        %v1315 = vmax.f32 %v1314, -1.0
        %v1316 = vmul.f32 %v1195, %v1195
        %v1317 = vmin.f32 16.0, %v1316
        %v1318 = vmul.f32 %v1317, 2.1237322e-06
        %v1319 = vadd.f32 %v1318, 0.00028619796
        %v1320 = vmul.f32 %v1317, %v1319
        %v1321 = vadd.f32 %v1320, 0.0036580483
        %v1322 = vmul.f32 %v1317, %v1321
        %v1323 = vadd.f32 %v1322, 0.05243302
        %v1324 = vmul.f32 %v1317, %v1323
        %v1325 = vadd.f32 %v1324, 0.18741608
        %v1326 = vmul.f32 %v1317, %v1325
        %v1327 = vadd.f32 %v1326, 1.1283791
        %v1328 = vmul.f32 %v1195, %v1327
        %v1329 = vmul.f32 %v1317, 3.8918573e-05
        %v1330 = vadd.f32 %v1329, 0.001143296
        %v1331 = vmul.f32 %v1317, %v1330
        %v1332 = vadd.f32 %v1331, 0.014752088
        %v1333 = vmul.f32 %v1317, %v1332
        %v1334 = vadd.f32 %v1333, 0.112945676
        %v1335 = vmul.f32 %v1317, %v1334
        %v1336 = vadd.f32 %v1335, 0.4994258
        %v1337 = vmul.f32 %v1317, %v1336
        %v1338 = vadd.f32 %v1337, 1.0
        %v1339 = vrcp.pop %v1338
        %v1340 = vmul.f32 %v1338, %v1339
        %v1341 = vsub.f32 1.0, %v1340
        %v1342 = vmul.f32 %v1339, %v1341
        %v1343 = vadd.f32 %v1339, %v1342
        %vm1344 = vweird.f32 %v1338
        %vm1345 = vweird.f32 %v1339
        %vm1346 = vmor %vm1344, %vm1345
        %v1347 = vsel %vm1346, %v1339, %v1343
        %v1348 = vand.u32 2147483647, %v1338
        %vm1349 = vcmp.eq.f32.partialorder %v1348, 8.507059e+37
        %v1350 = vand.u32 %v1338, 2147483648
        %v1351 = vor.u32 1.1754944e-38, %v1350
        %v1352 = vsel %vm1349, %v1351, %v1347
        %v1353 = vmul.f32 %v1328, %v1352
        %v1354 = vmin.f32 %v1353, 1.0
        %v1355 = vmax.f32 %v1354, -1.0
        %v1356 = vadd.f32 %v1235, 1.0
        %v1357 = vadd.f32 %v1275, 1.0
        %v1358 = vadd.f32 %v1315, 1.0
        %v1359 = vadd.f32 %v1355, 1.0
        %v1360 = vmul.f32 %v1188, %v1356
        %v1361 = vmul.f32 %v1189, %v1357
        %v1362 = vmul.f32 %v1190, %v1358
        %v1363 = vmul.f32 %v1191, %v1359
        %1364 = vst [vmem:[%s217 + $0x20] sm:$0xff] %v1360
        %1365 = vst [vmem:[%s217 + $0x28] sm:$0xff] %v1361
        %1366 = vst [vmem:[%s217 + $0x30] sm:$0xff] %v1362
        %1367 = vst [vmem:[%s217 + $0x38] sm:$0xff] %v1363
        %s1368 = sand.u32 %s137, 1
        %s1369 = scalar_lea.sflag [#allocation4], %s1368
        %s1370 = sand.u32 %s137, 1
        %s1371 = smul.addr %s1370, 64
        %s1372 = scalar_lea.vmem [#allocation3], %s1371
        // Predicated region
        $region41: #{tpu_custom_call.1} parent=39 // pred_check
          %p1373 = pneg %p147
        $region42: #{tpu_custom_call.1} parent=39 // pred_check_branch
          %1375 = sbr.rel (%p1373) target = $region44
        $region43: #{tpu_custom_call.1} parent=39 // pred_region
          %1377 = vsyncadd %s1369, 0
          %s1378 = smul.addr %s19, 8
          %s1379 = smul.addr %s1378, 8
          %s1380 = scalar_lea.hbm %s5, %s1379
          %s1381 = sshll.u32 %s1372, 4
          %s1382 = int_to_ptr.vmem [resolvable:$true] %s1381
          %s1383 = sshll.u32 %s1380, 4
          %s1384 = int_to_ptr.hbm [resolvable:$true] %s1383
          %1389 = dma.vmem_to_hbm [thread:$0]  %s1382, 1024, %s1384, %s1369, 256, 256, 16
        $region44: #{tpu_custom_call.1} parent=39 // pred_fallthru
          _
      $region40: #{tpu_custom_call.1} parent=5 // pred_fallthru
        _
      %p1390 = scmp.le.s32.totalorder 2, %s14
      // Predicated region
      $region45: #{tpu_custom_call.1} parent=5 // pred_check
        %p1391 = pneg %p1390
      $region46: #{tpu_custom_call.1} parent=5 // pred_check_branch
        %1393 = sbr.rel (%p1391) target = $region48
      $region47: #{tpu_custom_call.1} parent=5 // pred_region
        %s1394 = ssub.s32 %s14, 2
        // Predicated region
        $region49: #{tpu_custom_call.1} parent=47 // pred_check
          %p1395 = pneg %p153
        $region50: #{tpu_custom_call.1} parent=47 // pred_check_branch
          %1397 = sbr.rel (%p1395) target = $region52
        $region51: #{tpu_custom_call.1} parent=47 // pred_region
          %s1398 = sand.u32 %s138, 1
          %s1399 = scalar_lea.sflag [#allocation4], %s1398
          %s1400 = sand.u32 %s138, 1
          %s1401 = smul.addr %s1400, 64
          %s1402 = scalar_lea.vmem [#allocation3], %s1401
          %1404 = dma.done %s1399, 1024
        $region52: #{tpu_custom_call.1} parent=47 // pred_fallthru
          _
      $region48: #{tpu_custom_call.1} parent=5 // pred_fallthru
        _
    $region6: #{tpu_custom_call.1} parent=1 // loop_footer
      %s18 = sadd.s32 1, %s14
    $region7: #{tpu_custom_call.1} parent=1 // loop_footer_branch
      %13 = sbr.rel target = $region3
    $region8: #{tpu_custom_call.1} parent=1 // loop_exit
      _
    %1405 = vsyncpa [#allocation4], 1
    %s1406 = scalar_lea.sflag [#allocation4], 1
    %1407 = vsyncpa %s1406, 1

</llo_original>
